<compile_context>
chip_gen: v5e
topology: v5e:2x2
jax: 0.10.0
libtpu: 0.0.40
codegen_flags: <defaults>
</compile_context>

<pallas_src>
import functools

import jax
import jax.numpy as jnp
from jax import lax
from jax.experimental import pallas as pl
from jax.experimental.pallas import tpu as pltpu


def _leaky(v):
    return jnp.where(v > 0, v, 0.01 * v)


# ------------------------------ Pallas kernel ------------------------------ #

def fused_block_kernel(x4_ref, s1_ref, b1_ref, w1b_ref, b2_ref, w2c_ref,
                       b3_ref, w3_ref, wd4_ref, bd_ref, o_ref,
                       tpad_ref, taps_ref, *, Ho, Wo, Cout):
    """One grid step == one batch image; everything stays resident in VMEM.

    x4_ref : (N, 4*Cin), N = Ho*Wo.  Row (oh*Wo+ow) packs the 2x2 input patch
             of output position (oh, ow); channel group g = 2*rp + cp.
    tpad_ref : (2, 2, Ho+1, Wo+1, Cout) zero-padded, parity-split stage-1 map:
               tpad[p, q, a, b, :] == t2_padded[2a+p, 2b+q, :].
    taps_ref : (N, 9*Cout) im2col tap matrix (VMEM only, never touches HBM).
    """
    f32 = jnp.float32
    N = Ho * Wo

    x4 = x4_ref[...]                                             # (N, 4*Cin)

    # -- downsample branch: AvgPool(2,2) + Conv1x1 + BN folded into one matmul
    d = jnp.dot(x4, wd4_ref[...], preferred_element_type=f32) + bd_ref[...]

    # -- stage 1 (pointwise): BN1 + LeakyReLU, then the 1x1 conv for all four
    #    parity classes at once via a block-diagonal weight (BN2 scale folded
    #    into the columns), + BN2 shift + LeakyReLU.
    t = _leaky(x4 * s1_ref[...] + b1_ref[...])
    t2 = _leaky(jnp.dot(t, w1b_ref[...], preferred_element_type=f32)
                + b2_ref[...])                                   # (N, 4*Cout)

    # -- scatter t2 into the zero-padded parity-split scratch: the conv padding
    #    is the zero-init, and every stride-2 tap becomes a contiguous slice.
    tpad_ref[...] = jnp.zeros_like(tpad_ref)
    t2_3d = t2.reshape(Ho, Wo, 4 * Cout)
    for rp in range(2):
        p, a0 = (1, 0) if rp == 0 else (0, 1)
        for cp in range(2):
            q, b0 = (1, 0) if cp == 0 else (0, 1)
            g = 2 * rp + cp
            tpad_ref[p, q, a0:a0 + Ho, b0:b0 + Wo, :] = (
                t2_3d[:, :, g * Cout:(g + 1) * Cout])

    # -- gather the 9 taps into one contiguous (N, 9*Cout) matrix so the 3x3
    #    stride-2 conv is a single K = 9*Cout MXU matmul.
    for kh in range(3):
        p, a0 = ((0, 0), (1, 0), (0, 1))[kh]
        for kw in range(3):
            q, b0 = ((0, 0), (1, 0), (0, 1))[kw]
            k = kh * 3 + kw
            tap = tpad_ref[p, q, a0:a0 + Ho, b0:b0 + Wo, :]      # (Ho, Wo, Cout)
            taps_ref[:, k * Cout:(k + 1) * Cout] = tap.reshape(N, Cout)

    # -- 3x3 conv (BN3 scale folded into w2c) + shift + LeakyReLU, final 1x1
    #    conv, residual add, output LeakyReLU.
    u = _leaky(jnp.dot(taps_ref[...], w2c_ref[...],
                       preferred_element_type=f32) + b3_ref[...])
    conv_out = jnp.dot(u, w3_ref[...], preferred_element_type=f32)
    o_ref[...] = _leaky(conv_out + d)


# --------------------------------- wrapper ---------------------------------- #

def down_sample_basic_block(x_nhwc, p):
    B, H, W, Cin = x_nhwc.shape
    Cout = p["w3"].shape[0]
    assert H % 2 == 0 and W % 2 == 0, "spatial dims must be even"
    Ho, Wo = H // 2, W // 2
    N2 = Ho * Wo
    assert N2 % 8 == 0, "Ho*Wo must be a multiple of 8 (sublane granularity)"

    # Pack every 2x2 input patch into one row (pure layout glue on the small
    # Cin-wide input; the Cout-wide intermediates never leave VMEM).
    x4 = x_nhwc.reshape(B, Ho, 2, Wo, 2, Cin).transpose(0, 1, 3, 2, 4, 5)
    x4 = x4.reshape(B * N2, 4 * Cin)

    def _full(shape):
        return pl.BlockSpec(shape, lambda b, _n=len(shape): (0,) * _n)

    kernel = functools.partial(fused_block_kernel, Ho=Ho, Wo=Wo, Cout=Cout)

    out = pl.pallas_call(
        kernel,
        out_shape=jax.ShapeDtypeStruct((B * N2, Cout), jnp.float32),
        grid_spec=pltpu.PrefetchScalarGridSpec(
            num_scalar_prefetch=0,
            grid=(B,),
            in_specs=[pl.BlockSpec((N2, 4 * Cin), lambda b: (b, 0)),
                      _full(p["s1_4"].shape), _full(p["b1_4"].shape),
                      _full(p["w1b"].shape), _full(p["b2_4"].shape),
                      _full(p["w2c"].shape), _full(p["b3"].shape),
                      _full(p["w3"].shape), _full(p["wd4"].shape),
                      _full(p["bd"].shape)],
            out_specs=pl.BlockSpec((N2, Cout), lambda b: (b, 0)),
            scratch_shapes=[
                pltpu.VMEM((2, 2, Ho + 1, Wo + 1, Cout), jnp.float32),
                pltpu.VMEM((N2, 9 * Cout), jnp.float32)]),
        compiler_params=pltpu.CompilerParams(
            dimension_semantics=("parallel",),
            vmem_limit_bytes=32 * 1024 * 1024),
    )(x4, p["s1_4"], p["b1_4"], p["w1b"], p["b2_4"], p["w2c"], p["b3"],
      p["w3"], p["wd4"], p["bd"])

    return out.reshape(B, Ho, Wo, Cout)


# --------------------------- parameters & reference ------------------------- #

def make_params(key, cin, cout, eps=1e-5):
    ks = jax.random.split(key, 8)

    def conv_w(k, o, i, kh, kw):
        fan_in = i * kh * kw
        return jax.random.normal(k, (o, i, kh, kw), jnp.float32) / (fan_in ** 0.5)

    def bn(k, c):
        k1, k2, k3, k4 = jax.random.split(k, 4)
        gamma = 1.0 + 0.1 * jax.random.normal(k1, (c,), jnp.float32)
        beta = 0.1 * jax.random.normal(k2, (c,), jnp.float32)
        mean = 0.1 * jax.random.normal(k3, (c,), jnp.float32)
        var = jax.random.uniform(k4, (c,), jnp.float32, minval=0.5, maxval=1.5)
        scale = gamma / jnp.sqrt(var + eps)
        shift = beta - mean * scale
        return scale.reshape(1, c), shift.reshape(1, c)

    # PyTorch-layout weights (O, I, kh, kw).
    w1_pt = conv_w(ks[0], cout, cin, 1, 1)
    w2_pt = conv_w(ks[1], cout, cout, 3, 3)
    w3_pt = conv_w(ks[2], cout, cout, 1, 1)
    wd_pt = conv_w(ks[3], cout, cin, 1, 1)
    s1, b1 = bn(ks[4], cin)
    s2, b2 = bn(ks[5], cout)
    s3, b3 = bn(ks[6], cout)
    sd, bd = bn(ks[7], cout)

    # (I, O) matmul weights.
    w1 = w1_pt[:, :, 0, 0].T                                     # (cin, cout)
    w3 = w3_pt[:, :, 0, 0].T                                     # (cout, cout)
    wd = wd_pt[:, :, 0, 0].T                                     # (cin, cout)
    w2 = jnp.transpose(w2_pt, (2, 3, 1, 0)).reshape(9, cout, cout)  # (kh*3+kw, I, O)

    # Fold post-conv BN scales into the conv weight columns (perf review).
    w1s = w1 * s2                                                # BN2 scale
    w2s = (w2 * s3.reshape(1, 1, cout)).reshape(9 * cout, cout)  # BN3 scale
    wds = wd * sd                                                # downsample BN

    kparams = dict(
        s1_4=jnp.tile(s1, (1, 4)), b1_4=jnp.tile(b1, (1, 4)),
        w1b=jnp.kron(jnp.eye(4, dtype=jnp.float32), w1s),  # block-diag (4cin,4cout)
        b2_4=jnp.tile(b2, (1, 4)),
        w2c=w2s,                                            # (9*cout, cout)
        b3=b3, w3=w3,
        wd4=0.25 * jnp.concatenate([wds] * 4, axis=0),      # avg-pool folded in
        bd=bd,
    )
    ref_params = dict(
        s1=s1, b1=b1, s2=s2, b2=b2, s3=s3, b3=b3, sd=sd, bd=bd,
        w1=jnp.transpose(w1_pt, (2, 3, 1, 0)),              # HWIO for lax.conv
        w2=jnp.transpose(w2_pt, (2, 3, 1, 0)),
        w3=jnp.transpose(w3_pt, (2, 3, 1, 0)),
        wd=jnp.transpose(wd_pt, (2, 3, 1, 0)),
    )
    return kparams, ref_params


def reference(x_nhwc, rp):
    dn = ("NHWC", "HWIO", "NHWC")
    hp = lax.Precision.HIGHEST
    t = _leaky(x_nhwc * rp["s1"] + rp["b1"])
    t = lax.conv_general_dilated(t, rp["w1"], (1, 1), "VALID",
                                 dimension_numbers=dn, precision=hp)
    t = _leaky(t * rp["s2"] + rp["b2"])
    t = lax.conv_general_dilated(t, rp["w2"], (2, 2), ((1, 1), (1, 1)),
                                 dimension_numbers=dn, precision=hp)
    t = _leaky(t * rp["s3"] + rp["b3"])
    t = lax.conv_general_dilated(t, rp["w3"], (1, 1), "VALID",
                                 dimension_numbers=dn, precision=hp)
    B, H, W, C = x_nhwc.shape
    pool = x_nhwc.reshape(B, H // 2, 2, W // 2, 2, C).mean(axis=(2, 4))
    d = lax.conv_general_dilated(pool, rp["wd"], (1, 1), "VALID",
                                 dimension_numbers=dn, precision=hp)
    d = d * rp["sd"] + rp["bd"]
    return _leaky(d + t)


# ----------------------------------- main ----------------------------------- #

if __name__ == "__main__":
    B, Cin, Cout, H, W = 2, 4, 8, 16, 16
    key = jax.random.PRNGKey(0)
    kx, kp = jax.random.split(key)

    x_nchw = jax.random.normal(kx, (B, Cin, H, W), jnp.float32)   # PyTorch layout
    x_nhwc = jnp.transpose(x_nchw, (0, 2, 3, 1))                  # kernel layout

    kparams, ref_params = make_params(kp, Cin, Cout)

    out = down_sample_basic_block(x_nhwc, kparams)                # (B, H/2, W/2, Cout)
    out = jax.block_until_ready(out)

    expected = reference(x_nhwc, ref_params)
    assert out.shape == (B, H // 2, W // 2, Cout)
    err = float(jnp.max(jnp.abs(out - expected)))
    finite = bool(jnp.all(jnp.isfinite(out)))
    # Kernel uses default (single-pass bf16) MXU precision per the perf review,
    # reference is full-f32; expected numerical gap is O(1e-2), a real indexing
    # or folding bug would show up as O(1).
    if not (err < 5e-2 and finite):
        raise AssertionError(f"mismatch vs reference: max abs err {err}")

    print("KERNEL_OK")
</pallas_src>

<mosaic_0001>
module attributes {stable_mosaic.version = 11 : i64} {
  func.func @fused_block_kernel(%arg0: i32, %arg1: memref<64x16xf32, #tpu.memory_space<vmem>>, %arg2: memref<1x16xf32, #tpu.memory_space<vmem>>, %arg3: memref<1x16xf32, #tpu.memory_space<vmem>>, %arg4: memref<16x32xf32, #tpu.memory_space<vmem>>, %arg5: memref<1x32xf32, #tpu.memory_space<vmem>>, %arg6: memref<72x8xf32, #tpu.memory_space<vmem>>, %arg7: memref<1x8xf32, #tpu.memory_space<vmem>>, %arg8: memref<8x8xf32, #tpu.memory_space<vmem>>, %arg9: memref<16x8xf32, #tpu.memory_space<vmem>>, %arg10: memref<1x8xf32, #tpu.memory_space<vmem>>, %arg11: memref<64x8xf32, #tpu.memory_space<vmem>>, %arg12: memref<2x2x9x9x8xf32, #tpu.memory_space<vmem>>, %arg13: memref<64x72xf32, #tpu.memory_space<vmem>>) attributes {dimension_semantics = [#tpu.dimension_semantics<parallel>], iteration_bounds = array<i64: 2>, scalar_prefetch = 0 : i64, scratch_operands = 2 : i64, tpu.core_type = #tpu.core_type<tc>, window_params = [{transform_indices = @transform_0, window_bounds = array<i64: 64, 16>}, {pipeline_mode = #tpu.pipeline_mode<synchronous>, transform_indices = @transform_1, window_bounds = array<i64: 1, 16>}, {pipeline_mode = #tpu.pipeline_mode<synchronous>, transform_indices = @transform_2, window_bounds = array<i64: 1, 16>}, {pipeline_mode = #tpu.pipeline_mode<synchronous>, transform_indices = @transform_3, window_bounds = array<i64: 16, 32>}, {pipeline_mode = #tpu.pipeline_mode<synchronous>, transform_indices = @transform_4, window_bounds = array<i64: 1, 32>}, {pipeline_mode = #tpu.pipeline_mode<synchronous>, transform_indices = @transform_5, window_bounds = array<i64: 72, 8>}, {pipeline_mode = #tpu.pipeline_mode<synchronous>, transform_indices = @transform_6, window_bounds = array<i64: 1, 8>}, {pipeline_mode = #tpu.pipeline_mode<synchronous>, transform_indices = @transform_7, window_bounds = array<i64: 8, 8>}, {pipeline_mode = #tpu.pipeline_mode<synchronous>, transform_indices = @transform_8, window_bounds = array<i64: 16, 8>}, {pipeline_mode = #tpu.pipeline_mode<synchronous>, transform_indices = @transform_9, window_bounds = array<i64: 1, 8>}, {transform_indices = @transform_10, window_bounds = array<i64: 64, 8>}]} {
    %c0 = arith.constant 0 : index
    %c0_0 = arith.constant 0 : index
    %0 = vector.load %arg1[%c0, %c0_0] : memref<64x16xf32, #tpu.memory_space<vmem>>, vector<64x16xf32>
    %c0_1 = arith.constant 0 : index
    %c0_2 = arith.constant 0 : index
    %1 = vector.load %arg9[%c0_1, %c0_2] : memref<16x8xf32, #tpu.memory_space<vmem>>, vector<16x8xf32>
    %cst = arith.constant dense<0.000000e+00> : vector<64x8xf32>
    %2 = tpu.matmul %0, %1, %cst {dimension_numbers = #tpu.dot_dimension_numbers<[1], [0], [0], [1], [0, 0, 1, 1], [], []>} : vector<64x16xf32>, vector<16x8xf32>, vector<64x8xf32> -> vector<64x8xf32>
    %c0_3 = arith.constant 0 : index
    %c0_4 = arith.constant 0 : index
    %3 = vector.load %arg10[%c0_3, %c0_4] : memref<1x8xf32, #tpu.memory_space<vmem>>, vector<1x8xf32>
    %4 = vector.broadcast %3 : vector<1x8xf32> to vector<64x8xf32>
    %5 = arith.addf %2, %4 : vector<64x8xf32>
    %c0_5 = arith.constant 0 : index
    %c0_6 = arith.constant 0 : index
    %6 = vector.load %arg2[%c0_5, %c0_6] : memref<1x16xf32, #tpu.memory_space<vmem>>, vector<1x16xf32>
    %7 = vector.broadcast %6 : vector<1x16xf32> to vector<64x16xf32>
    %8 = arith.mulf %0, %7 : vector<64x16xf32>
    %c0_7 = arith.constant 0 : index
    %c0_8 = arith.constant 0 : index
    %9 = vector.load %arg3[%c0_7, %c0_8] : memref<1x16xf32, #tpu.memory_space<vmem>>, vector<1x16xf32>
    %10 = vector.broadcast %9 : vector<1x16xf32> to vector<64x16xf32>
    %11 = arith.addf %8, %10 : vector<64x16xf32>
    %cst_9 = arith.constant 0.000000e+00 : f32
    %12 = vector.broadcast %cst_9 : f32 to vector<64x16xf32>
    %13 = arith.cmpf ogt, %11, %12 : vector<64x16xf32>
    %cst_10 = arith.constant 0.00999999977 : f32
    %14 = vector.broadcast %cst_10 : f32 to vector<64x16xf32>
    %15 = arith.mulf %14, %11 : vector<64x16xf32>
    %16 = arith.select %13, %11, %15 : vector<64x16xi1>, vector<64x16xf32>
    %c0_11 = arith.constant 0 : index
    %c0_12 = arith.constant 0 : index
    %17 = vector.load %arg4[%c0_11, %c0_12] : memref<16x32xf32, #tpu.memory_space<vmem>>, vector<16x32xf32>
    %cst_13 = arith.constant dense<0.000000e+00> : vector<64x32xf32>
    %18 = tpu.matmul %16, %17, %cst_13 {dimension_numbers = #tpu.dot_dimension_numbers<[1], [0], [0], [1], [0, 0, 1, 1], [], []>} : vector<64x16xf32>, vector<16x32xf32>, vector<64x32xf32> -> vector<64x32xf32>
    %c0_14 = arith.constant 0 : index
    %c0_15 = arith.constant 0 : index
    %19 = vector.load %arg5[%c0_14, %c0_15] : memref<1x32xf32, #tpu.memory_space<vmem>>, vector<1x32xf32>
    %20 = vector.broadcast %19 : vector<1x32xf32> to vector<64x32xf32>
    %21 = arith.addf %18, %20 : vector<64x32xf32>
    %cst_16 = arith.constant 0.000000e+00 : f32
    %22 = vector.broadcast %cst_16 : f32 to vector<64x32xf32>
    %23 = arith.cmpf ogt, %21, %22 : vector<64x32xf32>
    %cst_17 = arith.constant 0.00999999977 : f32
    %24 = vector.broadcast %cst_17 : f32 to vector<64x32xf32>
    %25 = arith.mulf %24, %21 : vector<64x32xf32>
    %26 = arith.select %23, %21, %25 : vector<64x32xi1>, vector<64x32xf32>
    %cst_18 = arith.constant 0.000000e+00 : f32
    %27 = vector.broadcast %cst_18 : f32 to vector<2x2x9x9x8xf32>
    %c0_19 = arith.constant 0 : index
    %c0_20 = arith.constant 0 : index
    %c0_21 = arith.constant 0 : index
    %c0_22 = arith.constant 0 : index
    %c0_23 = arith.constant 0 : index
    %28 = vector.load %arg12[%c0_19, %c0_20, %c0_21, %c0_22, %c0_23] : memref<2x2x9x9x8xf32, #tpu.memory_space<vmem>>, vector<2x2x9x9x8xf32>
    tpu.vector_store %arg12[%c0_19, %c0_20, %c0_21, %c0_22, %c0_23], %27 {strides = array<i32>} : memref<2x2x9x9x8xf32, #tpu.memory_space<vmem>>, vector<2x2x9x9x8xf32>,
    %29 = vector.shape_cast %26 : vector<64x32xf32> to vector<8x8x32xf32>
    %30 = vector.extract_strided_slice %29 {offsets = [0, 0, 0], sizes = [8, 8, 8], strides = [1, 1, 1]} : vector<8x8x32xf32> to vector<8x8x8xf32>
    %c1 = arith.constant 1 : index
    %c1_24 = arith.constant 1 : index
    %c0_25 = arith.constant 0 : index
    %c0_26 = arith.constant 0 : index
    %c0_27 = arith.constant 0 : index
    %31 = vector.load %arg12[%c1, %c1_24, %c0_25, %c0_26, %c0_27] : memref<2x2x9x9x8xf32, #tpu.memory_space<vmem>>, vector<1x1x8x8x8xf32>
    %32 = vector.shape_cast %31 : vector<1x1x8x8x8xf32> to vector<8x8x8xf32>
    %33 = vector.shape_cast %30 : vector<8x8x8xf32> to vector<1x1x8x8x8xf32>
    tpu.vector_store %arg12[%c1, %c1_24, %c0_25, %c0_26, %c0_27], %33 {strides = array<i32>} : memref<2x2x9x9x8xf32, #tpu.memory_space<vmem>>, vector<1x1x8x8x8xf32>,
    %34 = vector.extract_strided_slice %29 {offsets = [0, 0, 8], sizes = [8, 8, 8], strides = [1, 1, 1]} : vector<8x8x32xf32> to vector<8x8x8xf32>
    %c1_28 = arith.constant 1 : index
    %c0_29 = arith.constant 0 : index
    %c0_30 = arith.constant 0 : index
    %c1_31 = arith.constant 1 : index
    %c0_32 = arith.constant 0 : index
    %35 = vector.load %arg12[%c1_28, %c0_29, %c0_30, %c1_31, %c0_32] : memref<2x2x9x9x8xf32, #tpu.memory_space<vmem>>, vector<1x1x8x8x8xf32>
    %36 = vector.shape_cast %35 : vector<1x1x8x8x8xf32> to vector<8x8x8xf32>
    %37 = vector.shape_cast %34 : vector<8x8x8xf32> to vector<1x1x8x8x8xf32>
    tpu.vector_store %arg12[%c1_28, %c0_29, %c0_30, %c1_31, %c0_32], %37 {strides = array<i32>} : memref<2x2x9x9x8xf32, #tpu.memory_space<vmem>>, vector<1x1x8x8x8xf32>,
    %38 = vector.extract_strided_slice %29 {offsets = [0, 0, 16], sizes = [8, 8, 8], strides = [1, 1, 1]} : vector<8x8x32xf32> to vector<8x8x8xf32>
    %c0_33 = arith.constant 0 : index
    %c1_34 = arith.constant 1 : index
    %c1_35 = arith.constant 1 : index
    %c0_36 = arith.constant 0 : index
    %c0_37 = arith.constant 0 : index
    %39 = vector.load %arg12[%c0_33, %c1_34, %c1_35, %c0_36, %c0_37] : memref<2x2x9x9x8xf32, #tpu.memory_space<vmem>>, vector<1x1x8x8x8xf32>
    %40 = vector.shape_cast %39 : vector<1x1x8x8x8xf32> to vector<8x8x8xf32>
    %41 = vector.shape_cast %38 : vector<8x8x8xf32> to vector<1x1x8x8x8xf32>
    tpu.vector_store %arg12[%c0_33, %c1_34, %c1_35, %c0_36, %c0_37], %41 {strides = array<i32>} : memref<2x2x9x9x8xf32, #tpu.memory_space<vmem>>, vector<1x1x8x8x8xf32>,
    %42 = vector.extract_strided_slice %29 {offsets = [0, 0, 24], sizes = [8, 8, 8], strides = [1, 1, 1]} : vector<8x8x32xf32> to vector<8x8x8xf32>
    %c0_38 = arith.constant 0 : index
    %c0_39 = arith.constant 0 : index
    %c1_40 = arith.constant 1 : index
    %c1_41 = arith.constant 1 : index
    %c0_42 = arith.constant 0 : index
    %43 = vector.load %arg12[%c0_38, %c0_39, %c1_40, %c1_41, %c0_42] : memref<2x2x9x9x8xf32, #tpu.memory_space<vmem>>, vector<1x1x8x8x8xf32>
    %44 = vector.shape_cast %43 : vector<1x1x8x8x8xf32> to vector<8x8x8xf32>
    %45 = vector.shape_cast %42 : vector<8x8x8xf32> to vector<1x1x8x8x8xf32>
    tpu.vector_store %arg12[%c0_38, %c0_39, %c1_40, %c1_41, %c0_42], %45 {strides = array<i32>} : memref<2x2x9x9x8xf32, #tpu.memory_space<vmem>>, vector<1x1x8x8x8xf32>,
    %c0_43 = arith.constant 0 : index
    %c0_44 = arith.constant 0 : index
    %c0_45 = arith.constant 0 : index
    %c0_46 = arith.constant 0 : index
    %c0_47 = arith.constant 0 : index
    %46 = vector.load %arg12[%c0_43, %c0_44, %c0_45, %c0_46, %c0_47] : memref<2x2x9x9x8xf32, #tpu.memory_space<vmem>>, vector<1x1x8x8x8xf32>
    %47 = vector.shape_cast %46 : vector<1x1x8x8x8xf32> to vector<8x8x8xf32>
    %48 = vector.shape_cast %47 : vector<8x8x8xf32> to vector<64x8xf32>
    %c0_48 = arith.constant 0 : index
    %c0_49 = arith.constant 0 : index
    %49 = vector.load %arg13[%c0_48, %c0_49] : memref<64x72xf32, #tpu.memory_space<vmem>>, vector<64x8xf32>
    tpu.vector_store %arg13[%c0_48, %c0_49], %48 {strides = array<i32>} : memref<64x72xf32, #tpu.memory_space<vmem>>, vector<64x8xf32>,
    %c0_50 = arith.constant 0 : index
    %c1_51 = arith.constant 1 : index
    %c0_52 = arith.constant 0 : index
    %c0_53 = arith.constant 0 : index
    %c0_54 = arith.constant 0 : index
    %50 = vector.load %arg12[%c0_50, %c1_51, %c0_52, %c0_53, %c0_54] : memref<2x2x9x9x8xf32, #tpu.memory_space<vmem>>, vector<1x1x8x8x8xf32>
    %51 = vector.shape_cast %50 : vector<1x1x8x8x8xf32> to vector<8x8x8xf32>
    %52 = vector.shape_cast %51 : vector<8x8x8xf32> to vector<64x8xf32>
    %c0_55 = arith.constant 0 : index
    %c8 = arith.constant 8 : index
    %53 = vector.load %arg13[%c0_55, %c8] : memref<64x72xf32, #tpu.memory_space<vmem>>, vector<64x8xf32>
    tpu.vector_store %arg13[%c0_55, %c8], %52 {strides = array<i32>} : memref<64x72xf32, #tpu.memory_space<vmem>>, vector<64x8xf32>,
    %c0_56 = arith.constant 0 : index
    %c0_57 = arith.constant 0 : index
    %c0_58 = arith.constant 0 : index
    %c1_59 = arith.constant 1 : index
    %c0_60 = arith.constant 0 : index
    %54 = vector.load %arg12[%c0_56, %c0_57, %c0_58, %c1_59, %c0_60] : memref<2x2x9x9x8xf32, #tpu.memory_space<vmem>>, vector<1x1x8x8x8xf32>
    %55 = vector.shape_cast %54 : vector<1x1x8x8x8xf32> to vector<8x8x8xf32>
    %56 = vector.shape_cast %55 : vector<8x8x8xf32> to vector<64x8xf32>
    %c0_61 = arith.constant 0 : index
    %c16 = arith.constant 16 : index
    %57 = vector.load %arg13[%c0_61, %c16] : memref<64x72xf32, #tpu.memory_space<vmem>>, vector<64x8xf32>
    tpu.vector_store %arg13[%c0_61, %c16], %56 {strides = array<i32>} : memref<64x72xf32, #tpu.memory_space<vmem>>, vector<64x8xf32>,
    %c1_62 = arith.constant 1 : index
    %c0_63 = arith.constant 0 : index
    %c0_64 = arith.constant 0 : index
    %c0_65 = arith.constant 0 : index
    %c0_66 = arith.constant 0 : index
    %58 = vector.load %arg12[%c1_62, %c0_63, %c0_64, %c0_65, %c0_66] : memref<2x2x9x9x8xf32, #tpu.memory_space<vmem>>, vector<1x1x8x8x8xf32>
    %59 = vector.shape_cast %58 : vector<1x1x8x8x8xf32> to vector<8x8x8xf32>
    %60 = vector.shape_cast %59 : vector<8x8x8xf32> to vector<64x8xf32>
    %c0_67 = arith.constant 0 : index
    %c24 = arith.constant 24 : index
    %61 = vector.load %arg13[%c0_67, %c24] : memref<64x72xf32, #tpu.memory_space<vmem>>, vector<64x8xf32>
    tpu.vector_store %arg13[%c0_67, %c24], %60 {strides = array<i32>} : memref<64x72xf32, #tpu.memory_space<vmem>>, vector<64x8xf32>,
    %c1_68 = arith.constant 1 : index
    %c1_69 = arith.constant 1 : index
    %c0_70 = arith.constant 0 : index
    %c0_71 = arith.constant 0 : index
    %c0_72 = arith.constant 0 : index
    %62 = vector.load %arg12[%c1_68, %c1_69, %c0_70, %c0_71, %c0_72] : memref<2x2x9x9x8xf32, #tpu.memory_space<vmem>>, vector<1x1x8x8x8xf32>
    %63 = vector.shape_cast %62 : vector<1x1x8x8x8xf32> to vector<8x8x8xf32>
    %64 = vector.shape_cast %63 : vector<8x8x8xf32> to vector<64x8xf32>
    %c0_73 = arith.constant 0 : index
    %c32 = arith.constant 32 : index
    %65 = vector.load %arg13[%c0_73, %c32] : memref<64x72xf32, #tpu.memory_space<vmem>>, vector<64x8xf32>
    tpu.vector_store %arg13[%c0_73, %c32], %64 {strides = array<i32>} : memref<64x72xf32, #tpu.memory_space<vmem>>, vector<64x8xf32>,
    %c1_74 = arith.constant 1 : index
    %c0_75 = arith.constant 0 : index
    %c0_76 = arith.constant 0 : index
    %c1_77 = arith.constant 1 : index
    %c0_78 = arith.constant 0 : index
    %66 = vector.load %arg12[%c1_74, %c0_75, %c0_76, %c1_77, %c0_78] : memref<2x2x9x9x8xf32, #tpu.memory_space<vmem>>, vector<1x1x8x8x8xf32>
    %67 = vector.shape_cast %66 : vector<1x1x8x8x8xf32> to vector<8x8x8xf32>
    %68 = vector.shape_cast %67 : vector<8x8x8xf32> to vector<64x8xf32>
    %c0_79 = arith.constant 0 : index
    %c40 = arith.constant 40 : index
    %69 = vector.load %arg13[%c0_79, %c40] : memref<64x72xf32, #tpu.memory_space<vmem>>, vector<64x8xf32>
    tpu.vector_store %arg13[%c0_79, %c40], %68 {strides = array<i32>} : memref<64x72xf32, #tpu.memory_space<vmem>>, vector<64x8xf32>,
    %c0_80 = arith.constant 0 : index
    %c0_81 = arith.constant 0 : index
    %c1_82 = arith.constant 1 : index
    %c0_83 = arith.constant 0 : index
    %c0_84 = arith.constant 0 : index
    %70 = vector.load %arg12[%c0_80, %c0_81, %c1_82, %c0_83, %c0_84] : memref<2x2x9x9x8xf32, #tpu.memory_space<vmem>>, vector<1x1x8x8x8xf32>
    %71 = vector.shape_cast %70 : vector<1x1x8x8x8xf32> to vector<8x8x8xf32>
    %72 = vector.shape_cast %71 : vector<8x8x8xf32> to vector<64x8xf32>
    %c0_85 = arith.constant 0 : index
    %c48 = arith.constant 48 : index
    %73 = vector.load %arg13[%c0_85, %c48] : memref<64x72xf32, #tpu.memory_space<vmem>>, vector<64x8xf32>
    tpu.vector_store %arg13[%c0_85, %c48], %72 {strides = array<i32>} : memref<64x72xf32, #tpu.memory_space<vmem>>, vector<64x8xf32>,
    %c0_86 = arith.constant 0 : index
    %c1_87 = arith.constant 1 : index
    %c1_88 = arith.constant 1 : index
    %c0_89 = arith.constant 0 : index
    %c0_90 = arith.constant 0 : index
    %74 = vector.load %arg12[%c0_86, %c1_87, %c1_88, %c0_89, %c0_90] : memref<2x2x9x9x8xf32, #tpu.memory_space<vmem>>, vector<1x1x8x8x8xf32>
    %75 = vector.shape_cast %74 : vector<1x1x8x8x8xf32> to vector<8x8x8xf32>
    %76 = vector.shape_cast %75 : vector<8x8x8xf32> to vector<64x8xf32>
    %c0_91 = arith.constant 0 : index
    %c56 = arith.constant 56 : index
    %77 = vector.load %arg13[%c0_91, %c56] : memref<64x72xf32, #tpu.memory_space<vmem>>, vector<64x8xf32>
    tpu.vector_store %arg13[%c0_91, %c56], %76 {strides = array<i32>} : memref<64x72xf32, #tpu.memory_space<vmem>>, vector<64x8xf32>,
    %c0_92 = arith.constant 0 : index
    %c0_93 = arith.constant 0 : index
    %c1_94 = arith.constant 1 : index
    %c1_95 = arith.constant 1 : index
    %c0_96 = arith.constant 0 : index
    %78 = vector.load %arg12[%c0_92, %c0_93, %c1_94, %c1_95, %c0_96] : memref<2x2x9x9x8xf32, #tpu.memory_space<vmem>>, vector<1x1x8x8x8xf32>
    %79 = vector.shape_cast %78 : vector<1x1x8x8x8xf32> to vector<8x8x8xf32>
    %80 = vector.shape_cast %79 : vector<8x8x8xf32> to vector<64x8xf32>
    %c0_97 = arith.constant 0 : index
    %c64 = arith.constant 64 : index
    %81 = vector.load %arg13[%c0_97, %c64] : memref<64x72xf32, #tpu.memory_space<vmem>>, vector<64x8xf32>
    tpu.vector_store %arg13[%c0_97, %c64], %80 {strides = array<i32>} : memref<64x72xf32, #tpu.memory_space<vmem>>, vector<64x8xf32>,
    %c0_98 = arith.constant 0 : index
    %c0_99 = arith.constant 0 : index
    %82 = vector.load %arg13[%c0_98, %c0_99] : memref<64x72xf32, #tpu.memory_space<vmem>>, vector<64x72xf32>
    %c0_100 = arith.constant 0 : index
    %c0_101 = arith.constant 0 : index
    %83 = vector.load %arg6[%c0_100, %c0_101] : memref<72x8xf32, #tpu.memory_space<vmem>>, vector<72x8xf32>
    %cst_102 = arith.constant dense<0.000000e+00> : vector<64x8xf32>
    %84 = tpu.matmul %82, %83, %cst_102 {dimension_numbers = #tpu.dot_dimension_numbers<[1], [0], [0], [1], [0, 0, 1, 1], [], []>} : vector<64x72xf32>, vector<72x8xf32>, vector<64x8xf32> -> vector<64x8xf32>
    %c0_103 = arith.constant 0 : index
    %c0_104 = arith.constant 0 : index
    %85 = vector.load %arg7[%c0_103, %c0_104] : memref<1x8xf32, #tpu.memory_space<vmem>>, vector<1x8xf32>
    %86 = vector.broadcast %85 : vector<1x8xf32> to vector<64x8xf32>
    %87 = arith.addf %84, %86 : vector<64x8xf32>
    %cst_105 = arith.constant 0.000000e+00 : f32
    %88 = vector.broadcast %cst_105 : f32 to vector<64x8xf32>
    %89 = arith.cmpf ogt, %87, %88 : vector<64x8xf32>
    %cst_106 = arith.constant 0.00999999977 : f32
    %90 = vector.broadcast %cst_106 : f32 to vector<64x8xf32>
    %91 = arith.mulf %90, %87 : vector<64x8xf32>
    %92 = arith.select %89, %87, %91 : vector<64x8xi1>, vector<64x8xf32>
    %c0_107 = arith.constant 0 : index
    %c0_108 = arith.constant 0 : index
    %93 = vector.load %arg8[%c0_107, %c0_108] : memref<8x8xf32, #tpu.memory_space<vmem>>, vector<8x8xf32>
    %cst_109 = arith.constant dense<0.000000e+00> : vector<64x8xf32>
    %94 = tpu.matmul %92, %93, %cst_109 {dimension_numbers = #tpu.dot_dimension_numbers<[1], [0], [0], [1], [0, 0, 1, 1], [], []>} : vector<64x8xf32>, vector<8x8xf32>, vector<64x8xf32> -> vector<64x8xf32>
    %95 = arith.addf %94, %5 : vector<64x8xf32>
    %cst_110 = arith.constant 0.000000e+00 : f32
    %96 = vector.broadcast %cst_110 : f32 to vector<64x8xf32>
    %97 = arith.cmpf ogt, %95, %96 : vector<64x8xf32>
    %cst_111 = arith.constant 0.00999999977 : f32
    %98 = vector.broadcast %cst_111 : f32 to vector<64x8xf32>
    %99 = arith.mulf %98, %95 : vector<64x8xf32>
    %100 = arith.select %97, %95, %99 : vector<64x8xi1>, vector<64x8xf32>
    %c0_112 = arith.constant 0 : index
    %c0_113 = arith.constant 0 : index
    %101 = vector.load %arg11[%c0_112, %c0_113] : memref<64x8xf32, #tpu.memory_space<vmem>>, vector<64x8xf32>
    tpu.vector_store %arg11[%c0_112, %c0_113], %100 {strides = array<i32>} : memref<64x8xf32, #tpu.memory_space<vmem>>, vector<64x8xf32>,
    return
  }
  func.func @transform_0(%arg0: i32) -> (i32, i32) {
    %c0_i32 = arith.constant 0 : i32
    %c0_i32_0 = arith.constant 0 : i32
    return %arg0, %c0_i32 : i32, i32
  }
  func.func @transform_1(%arg0: i32) -> (i32, i32) {
    %c0_i32 = arith.constant 0 : i32
    %c0_i32_0 = arith.constant 0 : i32
    %c0_i32_1 = arith.constant 0 : i32
    return %c0_i32, %c0_i32_0 : i32, i32
  }
  func.func @transform_2(%arg0: i32) -> (i32, i32) {
    %c0_i32 = arith.constant 0 : i32
    %c0_i32_0 = arith.constant 0 : i32
    %c0_i32_1 = arith.constant 0 : i32
    return %c0_i32, %c0_i32_0 : i32, i32
  }
  func.func @transform_3(%arg0: i32) -> (i32, i32) {
    %c0_i32 = arith.constant 0 : i32
    %c0_i32_0 = arith.constant 0 : i32
    %c0_i32_1 = arith.constant 0 : i32
    return %c0_i32, %c0_i32_0 : i32, i32
  }
  func.func @transform_4(%arg0: i32) -> (i32, i32) {
    %c0_i32 = arith.constant 0 : i32
    %c0_i32_0 = arith.constant 0 : i32
    %c0_i32_1 = arith.constant 0 : i32
    return %c0_i32, %c0_i32_0 : i32, i32
  }
  func.func @transform_5(%arg0: i32) -> (i32, i32) {
    %c0_i32 = arith.constant 0 : i32
    %c0_i32_0 = arith.constant 0 : i32
    %c0_i32_1 = arith.constant 0 : i32
    return %c0_i32, %c0_i32_0 : i32, i32
  }
  func.func @transform_6(%arg0: i32) -> (i32, i32) {
    %c0_i32 = arith.constant 0 : i32
    %c0_i32_0 = arith.constant 0 : i32
    %c0_i32_1 = arith.constant 0 : i32
    return %c0_i32, %c0_i32_0 : i32, i32
  }
  func.func @transform_7(%arg0: i32) -> (i32, i32) {
    %c0_i32 = arith.constant 0 : i32
    %c0_i32_0 = arith.constant 0 : i32
    %c0_i32_1 = arith.constant 0 : i32
    return %c0_i32, %c0_i32_0 : i32, i32
  }
  func.func @transform_8(%arg0: i32) -> (i32, i32) {
    %c0_i32 = arith.constant 0 : i32
    %c0_i32_0 = arith.constant 0 : i32
    %c0_i32_1 = arith.constant 0 : i32
    return %c0_i32, %c0_i32_0 : i32, i32
  }
  func.func @transform_9(%arg0: i32) -> (i32, i32) {
    %c0_i32 = arith.constant 0 : i32
    %c0_i32_0 = arith.constant 0 : i32
    %c0_i32_1 = arith.constant 0 : i32
    return %c0_i32, %c0_i32_0 : i32, i32
  }
  func.func @transform_10(%arg0: i32) -> (i32, i32) {
    %c0_i32 = arith.constant 0 : i32
    %c0_i32_0 = arith.constant 0 : i32
    return %arg0, %c0_i32 : i32, i32
  }
}

</mosaic_0001>

<llo_original>
// kernel: tpu_custom_call.1
$region0: #{tpu_custom_call.1}
  #allocation0 [shape = 'u32[]', space=smem, size = 0x4, offset = 0x4, fixed_abs, tag = 'smem constant byte address 0x4 - core index']
  #allocation1 [shape = 'u32[72,128]{1,0:T(1,128)}', space=vmem, size = 0x9000, scoped, tag = 'internal scratch']
  #allocation2 [shape = 'f32[2,2,9,9,8]{4,3,2,1,0:T(8,128)}', space=vmem, size = 0x48000, scoped, tag = 'scratch operand']
  #allocation3 [shape = 'f32[64,72]{1,0:T(8,128)}', space=vmem, size = 0x8000, scoped, tag = 'scratch operand']
  %s0 = inlined_call_operand.vmem [shape: f32[128,16], index: 0, kind: input, shape index: {}]
  %s1 = inlined_call_operand.vmem [shape: f32[1,16], index: 1, kind: input, shape index: {}]
  %s2 = inlined_call_operand.vmem [shape: f32[1,16], index: 2, kind: input, shape index: {}]
  %s3 = inlined_call_operand.vmem [shape: f32[16,32], index: 3, kind: input, shape index: {}]
  %s4 = inlined_call_operand.vmem [shape: f32[1,32], index: 4, kind: input, shape index: {}]
  %s5 = inlined_call_operand.vmem [shape: f32[72,8], index: 5, kind: input, shape index: {}]
  %s6 = inlined_call_operand.vmem [shape: f32[1,8], index: 6, kind: input, shape index: {}]
  %s7 = inlined_call_operand.vmem [shape: f32[8,8], index: 7, kind: input, shape index: {}]
  %s8 = inlined_call_operand.vmem [shape: f32[16,8], index: 8, kind: input, shape index: {}]
  %s9 = inlined_call_operand.vmem [shape: f32[1,8], index: 9, kind: input, shape index: {}]
  %s10 = inlined_call_operand.vmem [shape: f32[128,8], index: 10, kind: output, shape index: {}]
  %s11 = sld [smem:[#allocation0]]
  $region73: #{tpu_custom_call.1} parent=0
    _
  %s13 = ssub.s32 1, %s11
  %s14 = scalar_select 0, %s13, %s11
  loop: start=0, step=1, limit=4
  $region2: #{tpu_custom_call.1} parent=0 // loop_pre_header
    _
  $region3: #{tpu_custom_call.1} parent=0 // loop_header
    %s16 = sphi 0, %s20
    %p17 = scmp.ge.s32.totalorder %s16, 4
    %s26 = sphi 0, %s28
    %s29 = sphi 0, %s26
    %s30 = sphi 0, %s29
    %s46 = sphi 0, %s30
    %s50 = sphi 0, %s50
    %s52 = sphi 0, %s50
    %s53 = sphi 0, %s52
    %s67 = sphi 0, %s53
    %s71 = sphi 0, %s71
    %s73 = sphi 0, %s71
    %s74 = sphi 0, %s73
    %s88 = sphi 0, %s74
    %s92 = sphi 0, %s92
    %s94 = sphi 0, %s92
    %s95 = sphi 0, %s94
    %s109 = sphi 0, %s95
    %s113 = sphi 0, %s113
    %s115 = sphi 0, %s113
    %s116 = sphi 0, %s115
    %s130 = sphi 0, %s116
    %s134 = sphi 0, %s134
    %s136 = sphi 0, %s134
    %s137 = sphi 0, %s136
    %s151 = sphi 0, %s137
    %s155 = sphi 0, %s155
    %s157 = sphi 0, %s155
    %s158 = sphi 0, %s157
    %s172 = sphi 0, %s158
    %s176 = sphi 0, %s176
    %s178 = sphi 0, %s176
    %s179 = sphi 0, %s178
    %s193 = sphi 0, %s179
    %s197 = sphi 0, %s197
    %s199 = sphi 0, %s197
    %s200 = sphi 0, %s199
    %s214 = sphi 0, %s200
    %s218 = sphi 0, %s218
    %s220 = sphi 0, %s218
    %s221 = sphi 0, %s220
    %s235 = sphi 0, %s221
    %s241 = sphi 0, %s243
    %s244 = sphi 0, %s241
    %s245 = sphi 0, %s244
    %s261 = sphi 0, %s245
  $region4: #{tpu_custom_call.1} parent=0 // loop_header_branch
    %19 = sbr.rel (%p17) target = $region8
  $region5: #{tpu_custom_call.1} parent=0 // loop_body
    %s21 = ssub.s32 %s16, 1
    %s22 = ssub.s32 %s16, 2
    %s23 = sadd.s32 %s16, 1
    %s24 = ssub.s32 %s16, %s23
    %p25 = scmp.eq.s32.totalorder %s24, 0
    %s27 = sadd.s32 %s26, 1
    %s28 = scalar_select %p25, %s26, %s27
    %p31 = pneg %p25
    %p32 = scmp.eq.s32.totalorder %s16, 1
    %p33 = por %p31, %p32
    %p34 = scmp.ne.s32.totalorder %s26, %s29
    %p35 = scmp.eq.s32.totalorder %s16, 0
    %p36 = por %p34, %p35
    %p37 = scmp.ne.s32.totalorder %s26, %s29
    %p38 = scmp.eq.s32.totalorder %s21, 1
    %p39 = por %p37, %p38
    %p40 = scmp.ne.s32.totalorder %s29, %s30
    %p41 = scmp.eq.s32.totalorder %s21, 0
    %p42 = por %p40, %p41
    %p43 = scmp.ne.s32.totalorder %s29, %s30
    %p44 = scmp.eq.s32.totalorder %s22, 1
    %p45 = por %p43, %p44
    %p47 = scmp.ne.s32.totalorder %s30, %s46
    %p48 = scmp.eq.s32.totalorder %s22, 0
    %p49 = por %p47, %p48
    %s51 = sadd.s32 %s50, 1
    %p54 = scmp.eq.s32.totalorder %s16, 1
    %p55 = scmp.ne.s32.totalorder %s50, %s52
    %p56 = scmp.eq.s32.totalorder %s16, 0
    %p57 = por %p55, %p56
    %p58 = scmp.ne.s32.totalorder %s50, %s52
    %p59 = scmp.eq.s32.totalorder %s21, 1
    %p60 = por %p58, %p59
    %p61 = scmp.ne.s32.totalorder %s52, %s53
    %p62 = scmp.eq.s32.totalorder %s21, 0
    %p63 = por %p61, %p62
    %p64 = scmp.ne.s32.totalorder %s52, %s53
    %p65 = scmp.eq.s32.totalorder %s22, 1
    %p66 = por %p64, %p65
    %p68 = scmp.ne.s32.totalorder %s53, %s67
    %p69 = scmp.eq.s32.totalorder %s22, 0
    %p70 = por %p68, %p69
    %s72 = sadd.s32 %s71, 1
    %p75 = scmp.eq.s32.totalorder %s16, 1
    %p76 = scmp.ne.s32.totalorder %s71, %s73
    %p77 = scmp.eq.s32.totalorder %s16, 0
    %p78 = por %p76, %p77
    %p79 = scmp.ne.s32.totalorder %s71, %s73
    %p80 = scmp.eq.s32.totalorder %s21, 1
    %p81 = por %p79, %p80
    %p82 = scmp.ne.s32.totalorder %s73, %s74
    %p83 = scmp.eq.s32.totalorder %s21, 0
    %p84 = por %p82, %p83
    %p85 = scmp.ne.s32.totalorder %s73, %s74
    %p86 = scmp.eq.s32.totalorder %s22, 1
    %p87 = por %p85, %p86
    %p89 = scmp.ne.s32.totalorder %s74, %s88
    %p90 = scmp.eq.s32.totalorder %s22, 0
    %p91 = por %p89, %p90
    %s93 = sadd.s32 %s92, 1
    %p96 = scmp.eq.s32.totalorder %s16, 1
    %p97 = scmp.ne.s32.totalorder %s92, %s94
    %p98 = scmp.eq.s32.totalorder %s16, 0
    %p99 = por %p97, %p98
    %p100 = scmp.ne.s32.totalorder %s92, %s94
    %p101 = scmp.eq.s32.totalorder %s21, 1
    %p102 = por %p100, %p101
    %p103 = scmp.ne.s32.totalorder %s94, %s95
    %p104 = scmp.eq.s32.totalorder %s21, 0
    %p105 = por %p103, %p104
    %p106 = scmp.ne.s32.totalorder %s94, %s95
    %p107 = scmp.eq.s32.totalorder %s22, 1
    %p108 = por %p106, %p107
    %p110 = scmp.ne.s32.totalorder %s95, %s109
    %p111 = scmp.eq.s32.totalorder %s22, 0
    %p112 = por %p110, %p111
    %s114 = sadd.s32 %s113, 1
    %p117 = scmp.eq.s32.totalorder %s16, 1
    %p118 = scmp.ne.s32.totalorder %s113, %s115
    %p119 = scmp.eq.s32.totalorder %s16, 0
    %p120 = por %p118, %p119
    %p121 = scmp.ne.s32.totalorder %s113, %s115
    %p122 = scmp.eq.s32.totalorder %s21, 1
    %p123 = por %p121, %p122
    %p124 = scmp.ne.s32.totalorder %s115, %s116
    %p125 = scmp.eq.s32.totalorder %s21, 0
    %p126 = por %p124, %p125
    %p127 = scmp.ne.s32.totalorder %s115, %s116
    %p128 = scmp.eq.s32.totalorder %s22, 1
    %p129 = por %p127, %p128
    %p131 = scmp.ne.s32.totalorder %s116, %s130
    %p132 = scmp.eq.s32.totalorder %s22, 0
    %p133 = por %p131, %p132
    %s135 = sadd.s32 %s134, 1
    %p138 = scmp.eq.s32.totalorder %s16, 1
    %p139 = scmp.ne.s32.totalorder %s134, %s136
    %p140 = scmp.eq.s32.totalorder %s16, 0
    %p141 = por %p139, %p140
    %p142 = scmp.ne.s32.totalorder %s134, %s136
    %p143 = scmp.eq.s32.totalorder %s21, 1
    %p144 = por %p142, %p143
    %p145 = scmp.ne.s32.totalorder %s136, %s137
    %p146 = scmp.eq.s32.totalorder %s21, 0
    %p147 = por %p145, %p146
    %p148 = scmp.ne.s32.totalorder %s136, %s137
    %p149 = scmp.eq.s32.totalorder %s22, 1
    %p150 = por %p148, %p149
    %p152 = scmp.ne.s32.totalorder %s137, %s151
    %p153 = scmp.eq.s32.totalorder %s22, 0
    %p154 = por %p152, %p153
    %s156 = sadd.s32 %s155, 1
    %p159 = scmp.eq.s32.totalorder %s16, 1
    %p160 = scmp.ne.s32.totalorder %s155, %s157
    %p161 = scmp.eq.s32.totalorder %s16, 0
    %p162 = por %p160, %p161
    %p163 = scmp.ne.s32.totalorder %s155, %s157
    %p164 = scmp.eq.s32.totalorder %s21, 1
    %p165 = por %p163, %p164
    %p166 = scmp.ne.s32.totalorder %s157, %s158
    %p167 = scmp.eq.s32.totalorder %s21, 0
    %p168 = por %p166, %p167
    %p169 = scmp.ne.s32.totalorder %s157, %s158
    %p170 = scmp.eq.s32.totalorder %s22, 1
    %p171 = por %p169, %p170
    %p173 = scmp.ne.s32.totalorder %s158, %s172
    %p174 = scmp.eq.s32.totalorder %s22, 0
    %p175 = por %p173, %p174
    %s177 = sadd.s32 %s176, 1
    %p180 = scmp.eq.s32.totalorder %s16, 1
    %p181 = scmp.ne.s32.totalorder %s176, %s178
    %p182 = scmp.eq.s32.totalorder %s16, 0
    %p183 = por %p181, %p182
    %p184 = scmp.ne.s32.totalorder %s176, %s178
    %p185 = scmp.eq.s32.totalorder %s21, 1
    %p186 = por %p184, %p185
    %p187 = scmp.ne.s32.totalorder %s178, %s179
    %p188 = scmp.eq.s32.totalorder %s21, 0
    %p189 = por %p187, %p188
    %p190 = scmp.ne.s32.totalorder %s178, %s179
    %p191 = scmp.eq.s32.totalorder %s22, 1
    %p192 = por %p190, %p191
    %p194 = scmp.ne.s32.totalorder %s179, %s193
    %p195 = scmp.eq.s32.totalorder %s22, 0
    %p196 = por %p194, %p195
    %s198 = sadd.s32 %s197, 1
    %p201 = scmp.eq.s32.totalorder %s16, 1
    %p202 = scmp.ne.s32.totalorder %s197, %s199
    %p203 = scmp.eq.s32.totalorder %s16, 0
    %p204 = por %p202, %p203
    %p205 = scmp.ne.s32.totalorder %s197, %s199
    %p206 = scmp.eq.s32.totalorder %s21, 1
    %p207 = por %p205, %p206
    %p208 = scmp.ne.s32.totalorder %s199, %s200
    %p209 = scmp.eq.s32.totalorder %s21, 0
    %p210 = por %p208, %p209
    %p211 = scmp.ne.s32.totalorder %s199, %s200
    %p212 = scmp.eq.s32.totalorder %s22, 1
    %p213 = por %p211, %p212
    %p215 = scmp.ne.s32.totalorder %s200, %s214
    %p216 = scmp.eq.s32.totalorder %s22, 0
    %p217 = por %p215, %p216
    %s219 = sadd.s32 %s218, 1
    %p222 = scmp.eq.s32.totalorder %s16, 1
    %p223 = scmp.ne.s32.totalorder %s218, %s220
    %p224 = scmp.eq.s32.totalorder %s16, 0
    %p225 = por %p223, %p224
    %p226 = scmp.ne.s32.totalorder %s218, %s220
    %p227 = scmp.eq.s32.totalorder %s21, 1
    %p228 = por %p226, %p227
    %p229 = scmp.ne.s32.totalorder %s220, %s221
    %p230 = scmp.eq.s32.totalorder %s21, 0
    %p231 = por %p229, %p230
    %p232 = scmp.ne.s32.totalorder %s220, %s221
    %p233 = scmp.eq.s32.totalorder %s22, 1
    %p234 = por %p232, %p233
    %p236 = scmp.ne.s32.totalorder %s221, %s235
    %p237 = scmp.eq.s32.totalorder %s22, 0
    %p238 = por %p236, %p237
    %s239 = ssub.s32 %s16, %s23
    %p240 = scmp.eq.s32.totalorder %s239, 0
    %s242 = sadd.s32 %s241, 1
    %s243 = scalar_select %p240, %s241, %s242
    %p246 = pneg %p240
    %p247 = scmp.eq.s32.totalorder %s16, 1
    %p248 = por %p246, %p247
    %p249 = scmp.ne.s32.totalorder %s241, %s244
    %p250 = scmp.eq.s32.totalorder %s16, 0
    %p251 = por %p249, %p250
    %p252 = scmp.ne.s32.totalorder %s241, %s244
    %p253 = scmp.eq.s32.totalorder %s21, 1
    %p254 = por %p252, %p253
    %p255 = scmp.ne.s32.totalorder %s244, %s245
    %p256 = scmp.eq.s32.totalorder %s21, 0
    %p257 = por %p255, %p256
    %p258 = scmp.ne.s32.totalorder %s244, %s245
    %p259 = scmp.eq.s32.totalorder %s22, 1
    %p260 = por %p258, %p259
    %p262 = scmp.ne.s32.totalorder %s245, %s261
    %p263 = scmp.eq.s32.totalorder %s22, 0
    %p264 = por %p262, %p263
    %p265 = scmp.le.s32.totalorder 1, %s16
    %p266 = scmp.lt.s32.totalorder %s16, 3
    %p267 = pnand %p265, %p266
    %p268 = pneg %p267
    // Predicated region
    $region9: #{tpu_custom_call.1} parent=5 // pred_check
      _
    $region10: #{tpu_custom_call.1} parent=5 // pred_check_branch
      %270 = sbr.rel (%p267) target = $region12
    $region11: #{tpu_custom_call.1} parent=5 // pred_region
      %s271 = ssub.s32 %s16, 1
      // Predicated region
      $region13: #{tpu_custom_call.1} parent=11 // pred_check
        %p272 = pneg %p63
      $region14: #{tpu_custom_call.1} parent=11 // pred_check_branch
        %274 = sbr.rel (%p272) target = $region16
      $region15: #{tpu_custom_call.1} parent=11 // pred_region
        _
      $region16: #{tpu_custom_call.1} parent=11 // pred_fallthru
        _
      // Predicated region
      $region17: #{tpu_custom_call.1} parent=11 // pred_check
        %p275 = pneg %p84
      $region18: #{tpu_custom_call.1} parent=11 // pred_check_branch
        %277 = sbr.rel (%p275) target = $region20
      $region19: #{tpu_custom_call.1} parent=11 // pred_region
        _
      $region20: #{tpu_custom_call.1} parent=11 // pred_fallthru
        _
      // Predicated region
      $region21: #{tpu_custom_call.1} parent=11 // pred_check
        %p278 = pneg %p105
      $region22: #{tpu_custom_call.1} parent=11 // pred_check_branch
        %280 = sbr.rel (%p278) target = $region24
      $region23: #{tpu_custom_call.1} parent=11 // pred_region
        _
      $region24: #{tpu_custom_call.1} parent=11 // pred_fallthru
        _
      // Predicated region
      $region25: #{tpu_custom_call.1} parent=11 // pred_check
        %p281 = pneg %p126
      $region26: #{tpu_custom_call.1} parent=11 // pred_check_branch
        %283 = sbr.rel (%p281) target = $region28
      $region27: #{tpu_custom_call.1} parent=11 // pred_region
        _
      $region28: #{tpu_custom_call.1} parent=11 // pred_fallthru
        _
      // Predicated region
      $region29: #{tpu_custom_call.1} parent=11 // pred_check
        %p284 = pneg %p147
      $region30: #{tpu_custom_call.1} parent=11 // pred_check_branch
        %286 = sbr.rel (%p284) target = $region32
      $region31: #{tpu_custom_call.1} parent=11 // pred_region
        _
      $region32: #{tpu_custom_call.1} parent=11 // pred_fallthru
        _
      // Predicated region
      $region33: #{tpu_custom_call.1} parent=11 // pred_check
        %p287 = pneg %p168
      $region34: #{tpu_custom_call.1} parent=11 // pred_check_branch
        %289 = sbr.rel (%p287) target = $region36
      $region35: #{tpu_custom_call.1} parent=11 // pred_region
        _
      $region36: #{tpu_custom_call.1} parent=11 // pred_fallthru
        _
      // Predicated region
      $region37: #{tpu_custom_call.1} parent=11 // pred_check
        %p290 = pneg %p189
      $region38: #{tpu_custom_call.1} parent=11 // pred_check_branch
        %292 = sbr.rel (%p290) target = $region40
      $region39: #{tpu_custom_call.1} parent=11 // pred_region
        _
      $region40: #{tpu_custom_call.1} parent=11 // pred_fallthru
        _
      // Predicated region
      $region41: #{tpu_custom_call.1} parent=11 // pred_check
        %p293 = pneg %p210
      $region42: #{tpu_custom_call.1} parent=11 // pred_check_branch
        %295 = sbr.rel (%p293) target = $region44
      $region43: #{tpu_custom_call.1} parent=11 // pred_region
        _
      $region44: #{tpu_custom_call.1} parent=11 // pred_fallthru
        _
      // Predicated region
      $region45: #{tpu_custom_call.1} parent=11 // pred_check
        %p296 = pneg %p231
      $region46: #{tpu_custom_call.1} parent=11 // pred_check_branch
        %298 = sbr.rel (%p296) target = $region48
      $region47: #{tpu_custom_call.1} parent=11 // pred_region
        _
      $region48: #{tpu_custom_call.1} parent=11 // pred_fallthru
        _
    $region12: #{tpu_custom_call.1} parent=5 // pred_fallthru
      _
    %p299 = scmp.lt.s32.totalorder %s16, 2
    // Predicated region
    $region49: #{tpu_custom_call.1} parent=5 // pred_check
      %p300 = pneg %p299
    $region50: #{tpu_custom_call.1} parent=5 // pred_check_branch
      %302 = sbr.rel (%p300) target = $region52
    $region51: #{tpu_custom_call.1} parent=5 // pred_region
      // Predicated region
      $region53: #{tpu_custom_call.1} parent=51 // pred_check
        %p303 = pneg %p36
      $region54: #{tpu_custom_call.1} parent=51 // pred_check_branch
        %305 = sbr.rel (%p303) target = $region56
      $region55: #{tpu_custom_call.1} parent=51 // pred_region
        %s306 = smul.u32 8, %s16
        %p307 = scmp.lt.s32.totalorder %s306, 15
        %s308 = scalar_select %p307, %s306, 15
        %s309 = smul.addr %s308, 8
        %s310 = scalar_lea.vmem %s0, %s309
        %s311 = smul.u32 8, %s16
      $region56: #{tpu_custom_call.1} parent=51 // pred_fallthru
        _
    $region52: #{tpu_custom_call.1} parent=5 // pred_fallthru
      _
    %p312 = scmp.le.s32.totalorder 1, %s16
    %p313 = scmp.lt.s32.totalorder %s16, 3
    %p314 = pnand %p312, %p313
    %p315 = pneg %p314
    // Predicated region
    $region57: #{tpu_custom_call.1} parent=5 // pred_check
      _
    $region58: #{tpu_custom_call.1} parent=5 // pred_check_branch
      %317 = sbr.rel (%p314) target = $region60
    $region59: #{tpu_custom_call.1} parent=5 // pred_region
      %s318 = ssub.s32 %s16, 1
      %s319 = smul.u32 8, %s21
      %p320 = scmp.lt.s32.totalorder %s319, 15
      %s321 = scalar_select %p320, %s319, 15
      %s322 = smul.addr %s321, 8
      %s323 = scalar_lea.vmem %s0, %s322
      %p324 = pneg %p42
      %p325 = pneg %p39
      %p326 = pneg %p63
      %p327 = pneg %p60
      %p328 = pneg %p84
      %p329 = pneg %p81
      %p330 = pneg %p105
      %p331 = pneg %p102
      %p332 = pneg %p126
      %p333 = pneg %p123
      %p334 = pneg %p147
      %p335 = pneg %p144
      %p336 = pneg %p168
      %p337 = pneg %p165
      %p338 = pneg %p189
      %p339 = pneg %p186
      %p340 = pneg %p210
      %p341 = pneg %p207
      %p342 = pneg %p231
      %p343 = pneg %p228
      %p344 = pneg %p257
      %p345 = pneg %p254
      %s346 = smul.u32 8, %s21
      %p347 = scmp.lt.s32.totalorder %s346, 15
      %s348 = scalar_select %p347, %s346, 15
      %s349 = smul.addr %s348, 8
      %s350 = scalar_lea.vmem %s10, %s349
      %s351 = smul.u32 8, %s21
      %p352 = scmp.lt.s32.totalorder %s351, 15
      %s353 = scalar_select %p352, %s351, 15
      %s354 = smul.addr %s353, 8
      %s355 = scalar_lea.vmem %s0, %s354
      %s356 = smul.u32 8, %s21
      %s357 = smul.u32 8, %s21
      %p358 = scmp.lt.s32.totalorder %s357, 15
      %s359 = scalar_select %p358, %s357, 15
      %s360 = smul.addr %s359, 8
      %s361 = scalar_lea.vmem %s10, %s360
      %s362 = smul.u32 8, %s21
      %v363 = vld [vmem:[%s355] sm:$0xff]
      %v364 = vld [vmem:[%s355 + $0x8] sm:$0xff]
      %v365 = vld [vmem:[%s355 + $0x10] sm:$0xff]
      %v366 = vld [vmem:[%s355 + $0x18] sm:$0xff]
      %v367 = vld [vmem:[%s355 + $0x20] sm:$0xff]
      %v368 = vld [vmem:[%s355 + $0x28] sm:$0xff]
      %v369 = vld [vmem:[%s355 + $0x30] sm:$0xff]
      %v370 = vld [vmem:[%s355 + $0x38] sm:$0xff]
      %v371 = vld [vmem:[%s8] sm:$0xff]
      %v372 = vld [vmem:[%s8 + $0x8] sm:$0xff]
      %v373 = vld [vmem:[%s9] sm:$0x1]
      %v375 = vperm.slane %v373, 0
      %vm377 = vcmask 130048
      %v379 = vsel %vm377, %v363, 0
      %v382 = vsel %vm377, %v364, 0
      %v385 = vsel %vm377, %v365, 0
      %v388 = vsel %vm377, %v366, 0
      %v391 = vsel %vm377, %v367, 0
      %v394 = vsel %vm377, %v368, 0
      %v397 = vsel %vm377, %v369, 0
      %v400 = vsel %vm377, %v370, 0
      %402 = vmatpush.msra.mxu0 0.0
      %403 = vmatpush.msra.mxu0 0.0
      %404 = vmatpush.msra.mxu0 0.0
      %405 = vmatpush.msra.mxu0 0.0
      %406 = vmatpush.msra.mxu0 0.0
      %407 = vmatpush.msra.mxu0 0.0
      %408 = vmatpush.msra.mxu0 0.0
      %409 = vmatpush.msra.mxu0 0.0
      %410 = vmatpush.msra.mxu0 0.0
      %411 = vmatpush.msra.mxu0 0.0
      %412 = vmatpush.msra.mxu0 0.0
      %413 = vmatpush.msra.mxu0 0.0
      %414 = vmatpush.msra.mxu0 0.0
      %415 = vmatpush.msra.mxu0 0.0
      %416 = vmatpush.msra.mxu0 %v372
      %417 = vmatpush.msra.mxu0 %v371
      %418 = vmatmul.f32.gmra.mxu0 %v379
      %v419 = vpop.f32.mrf.mxu0
      %v420 = vadd.f32 %v375, %v419
      %421 = vmatmul.f32.gmra.mxu0 %v382
      %v422 = vpop.f32.mrf.mxu0
      %v423 = vadd.f32 %v375, %v422
      %424 = vmatmul.f32.gmra.mxu0 %v385
      %v425 = vpop.f32.mrf.mxu0
      %v426 = vadd.f32 %v375, %v425
      %427 = vmatmul.f32.gmra.mxu0 %v388
      %v428 = vpop.f32.mrf.mxu0
      %v429 = vadd.f32 %v375, %v428
      %430 = vmatmul.f32.gmra.mxu0 %v391
      %v431 = vpop.f32.mrf.mxu0
      %v432 = vadd.f32 %v375, %v431
      %433 = vmatmul.f32.gmra.mxu0 %v394
      %v434 = vpop.f32.mrf.mxu0
      %v435 = vadd.f32 %v375, %v434
      %436 = vmatmul.f32.gmra.mxu0 %v397
      %v437 = vpop.f32.mrf.mxu0
      %v438 = vadd.f32 %v375, %v437
      %439 = vmatmul.f32.gmra.mxu0 %v400
      %v440 = vpop.f32.mrf.mxu0
      %v441 = vadd.f32 %v375, %v440
      %442 = vdwg.mxu0
      %v443 = vld [vmem:[%s1] sm:$0x1]
      %v445 = vperm.slane %v443, 0
      %v447 = vmul.f32 %v363, %v445
      %v448 = vmul.f32 %v364, %v445
      %v449 = vmul.f32 %v365, %v445
      %v450 = vmul.f32 %v366, %v445
      %v451 = vmul.f32 %v367, %v445
      %v452 = vmul.f32 %v368, %v445
      %v453 = vmul.f32 %v369, %v445
      %v454 = vmul.f32 %v370, %v445
      %v455 = vld [vmem:[%s2] sm:$0x1]
      %v457 = vperm.slane %v455, 0
      %v459 = vadd.f32 %v447, %v457
      %v460 = vadd.f32 %v448, %v457
      %v461 = vadd.f32 %v449, %v457
      %v462 = vadd.f32 %v450, %v457
      %v463 = vadd.f32 %v451, %v457
      %v464 = vadd.f32 %v452, %v457
      %v465 = vadd.f32 %v453, %v457
      %v466 = vadd.f32 %v454, %v457
      %vm467 = vcmp.gt.f32.partialorder %v459, 0.0
      %vm468 = vcmp.gt.f32.partialorder %v460, 0.0
      %vm469 = vcmp.gt.f32.partialorder %v461, 0.0
      %vm470 = vcmp.gt.f32.partialorder %v462, 0.0
      %vm471 = vcmp.gt.f32.partialorder %v463, 0.0
      %vm472 = vcmp.gt.f32.partialorder %v464, 0.0
      %vm473 = vcmp.gt.f32.partialorder %v465, 0.0
      %vm474 = vcmp.gt.f32.partialorder %v466, 0.0
      %v475 = vmul.f32 %v459, 0.01
      %v476 = vmul.f32 %v460, 0.01
      %v477 = vmul.f32 %v461, 0.01
      %v478 = vmul.f32 %v462, 0.01
      %v479 = vmul.f32 %v463, 0.01
      %v480 = vmul.f32 %v464, 0.01
      %v481 = vmul.f32 %v465, 0.01
      %v482 = vmul.f32 %v466, 0.01
      %v483 = vsel %vm467, %v459, %v475
      %v484 = vsel %vm468, %v460, %v476
      %v485 = vsel %vm469, %v461, %v477
      %v486 = vsel %vm470, %v462, %v478
      %v487 = vsel %vm471, %v463, %v479
      %v488 = vsel %vm472, %v464, %v480
      %v489 = vsel %vm473, %v465, %v481
      %v490 = vsel %vm474, %v466, %v482
      %v491 = vld [vmem:[%s3] sm:$0xff]
      %v492 = vld [vmem:[%s3 + $0x8] sm:$0xff]
      %v493 = vld [vmem:[%s4] sm:$0x1]
      %v495 = vperm.slane %v493, 0
      %v498 = vsel %vm377, %v483, 0
      %v501 = vsel %vm377, %v484, 0
      %v504 = vsel %vm377, %v485, 0
      %v507 = vsel %vm377, %v486, 0
      %v510 = vsel %vm377, %v487, 0
      %v513 = vsel %vm377, %v488, 0
      %v516 = vsel %vm377, %v489, 0
      %v519 = vsel %vm377, %v490, 0
      %521 = vmatpush.msra.mxu0 0.0
      %522 = vmatpush.msra.mxu0 0.0
      %523 = vmatpush.msra.mxu0 0.0
      %524 = vmatpush.msra.mxu0 0.0
      %525 = vmatpush.msra.mxu0 0.0
      %526 = vmatpush.msra.mxu0 0.0
      %527 = vmatpush.msra.mxu0 0.0
      %528 = vmatpush.msra.mxu0 0.0
      %529 = vmatpush.msra.mxu0 0.0
      %530 = vmatpush.msra.mxu0 0.0
      %531 = vmatpush.msra.mxu0 0.0
      %532 = vmatpush.msra.mxu0 0.0
      %533 = vmatpush.msra.mxu0 0.0
      %534 = vmatpush.msra.mxu0 0.0
      %535 = vmatpush.msra.mxu0 %v492
      %536 = vmatpush.msra.mxu0 %v491
      %537 = vmatmul.f32.gmra.mxu0 %v498
      %v538 = vpop.f32.mrf.mxu0
      %v539 = vadd.f32 %v495, %v538
      %540 = vmatmul.f32.gmra.mxu0 %v501
      %v541 = vpop.f32.mrf.mxu0
      %v542 = vadd.f32 %v495, %v541
      %543 = vmatmul.f32.gmra.mxu0 %v504
      %v544 = vpop.f32.mrf.mxu0
      %v545 = vadd.f32 %v495, %v544
      %546 = vmatmul.f32.gmra.mxu0 %v507
      %v547 = vpop.f32.mrf.mxu0
      %v548 = vadd.f32 %v495, %v547
      %549 = vmatmul.f32.gmra.mxu0 %v510
      %v550 = vpop.f32.mrf.mxu0
      %v551 = vadd.f32 %v495, %v550
      %552 = vmatmul.f32.gmra.mxu0 %v513
      %v553 = vpop.f32.mrf.mxu0
      %v554 = vadd.f32 %v495, %v553
      %555 = vmatmul.f32.gmra.mxu0 %v516
      %v556 = vpop.f32.mrf.mxu0
      %v557 = vadd.f32 %v495, %v556
      %558 = vmatmul.f32.gmra.mxu0 %v519
      %v559 = vpop.f32.mrf.mxu0
      %v560 = vadd.f32 %v495, %v559
      %561 = vdwg.mxu0
      %vm562 = vcmp.gt.f32.partialorder %v539, 0.0
      %vm563 = vcmp.gt.f32.partialorder %v542, 0.0
      %vm564 = vcmp.gt.f32.partialorder %v545, 0.0
      %vm565 = vcmp.gt.f32.partialorder %v548, 0.0
      %vm566 = vcmp.gt.f32.partialorder %v551, 0.0
      %vm567 = vcmp.gt.f32.partialorder %v554, 0.0
      %vm568 = vcmp.gt.f32.partialorder %v557, 0.0
      %vm569 = vcmp.gt.f32.partialorder %v560, 0.0
      %v570 = vmul.f32 %v539, 0.01
      %v571 = vmul.f32 %v542, 0.01
      %v572 = vmul.f32 %v545, 0.01
      %v573 = vmul.f32 %v548, 0.01
      %v574 = vmul.f32 %v551, 0.01
      %v575 = vmul.f32 %v554, 0.01
      %v576 = vmul.f32 %v557, 0.01
      %v577 = vmul.f32 %v560, 0.01
      %v578 = vsel %vm562, %v539, %v570
      %v579 = vsel %vm563, %v542, %v571
      %v580 = vsel %vm564, %v545, %v572
      %v581 = vsel %vm565, %v548, %v573
      %v582 = vsel %vm566, %v551, %v574
      %v583 = vsel %vm567, %v554, %v575
      %v584 = vsel %vm568, %v557, %v576
      %v585 = vsel %vm569, %v560, %v577
      %vm586 = vcmask 64512
      %587 = vst.msk [vmem:[#allocation2] sm:$0xff] %vm586, 0.0
      %vm588 = vcmask 57344
      %589 = vst.msk [vmem:[#allocation2 + $0x8] sm:$0x1] %vm588, 0.0
      %590 = vst.msk [vmem:[#allocation2 + $0x10] sm:$0xff] %vm586, 0.0
      %591 = vst.msk [vmem:[#allocation2 + $0x18] sm:$0x1] %vm588, 0.0
      %592 = vst.msk [vmem:[#allocation2 + $0x20] sm:$0xff] %vm586, 0.0
      %593 = vst.msk [vmem:[#allocation2 + $0x28] sm:$0x1] %vm588, 0.0
      %594 = vst.msk [vmem:[#allocation2 + $0x30] sm:$0xff] %vm586, 0.0
      %595 = vst.msk [vmem:[#allocation2 + $0x38] sm:$0x1] %vm588, 0.0
      %596 = vst.msk [vmem:[#allocation2 + $0x40] sm:$0xff] %vm586, 0.0
      %597 = vst.msk [vmem:[#allocation2 + $0x48] sm:$0x1] %vm588, 0.0
      %598 = vst.msk [vmem:[#allocation2 + $0x50] sm:$0xff] %vm586, 0.0
      %599 = vst.msk [vmem:[#allocation2 + $0x58] sm:$0x1] %vm588, 0.0
      %600 = vst.msk [vmem:[#allocation2 + $0x60] sm:$0xff] %vm586, 0.0
      %601 = vst.msk [vmem:[#allocation2 + $0x68] sm:$0x1] %vm588, 0.0
      %602 = vst.msk [vmem:[#allocation2 + $0x70] sm:$0xff] %vm586, 0.0
      %603 = vst.msk [vmem:[#allocation2 + $0x78] sm:$0x1] %vm588, 0.0
      %604 = vst.msk [vmem:[#allocation2 + $0x80] sm:$0xff] %vm586, 0.0
      %605 = vst.msk [vmem:[#allocation2 + $0x88] sm:$0x1] %vm588, 0.0
      %606 = vst.msk [vmem:[#allocation2 + $0x90] sm:$0xff] %vm586, 0.0
      %607 = vst.msk [vmem:[#allocation2 + $0x98] sm:$0x1] %vm588, 0.0
      %608 = vst.msk [vmem:[#allocation2 + $0xa0] sm:$0xff] %vm586, 0.0
      %609 = vst.msk [vmem:[#allocation2 + $0xa8] sm:$0x1] %vm588, 0.0
      %610 = vst.msk [vmem:[#allocation2 + $0xb0] sm:$0xff] %vm586, 0.0
      %611 = vst.msk [vmem:[#allocation2 + $0xb8] sm:$0x1] %vm588, 0.0
      %612 = vst.msk [vmem:[#allocation2 + $0xc0] sm:$0xff] %vm586, 0.0
      %613 = vst.msk [vmem:[#allocation2 + $0xc8] sm:$0x1] %vm588, 0.0
      %614 = vst.msk [vmem:[#allocation2 + $0xd0] sm:$0xff] %vm586, 0.0
      %615 = vst.msk [vmem:[#allocation2 + $0xd8] sm:$0x1] %vm588, 0.0
      %616 = vst.msk [vmem:[#allocation2 + $0xe0] sm:$0xff] %vm586, 0.0
      %617 = vst.msk [vmem:[#allocation2 + $0xe8] sm:$0x1] %vm588, 0.0
      %618 = vst.msk [vmem:[#allocation2 + $0xf0] sm:$0xff] %vm586, 0.0
      %619 = vst.msk [vmem:[#allocation2 + $0xf8] sm:$0x1] %vm588, 0.0
      %620 = vst.msk [vmem:[#allocation2 + $0x100] sm:$0xff] %vm586, 0.0
      %621 = vst.msk [vmem:[#allocation2 + $0x108] sm:$0x1] %vm588, 0.0
      %622 = vst.msk [vmem:[#allocation2 + $0x110] sm:$0xff] %vm586, 0.0
      %623 = vst.msk [vmem:[#allocation2 + $0x118] sm:$0x1] %vm588, 0.0
      %624 = vst.msk [vmem:[#allocation2 + $0x120] sm:$0xff] %vm586, 0.0
      %625 = vst.msk [vmem:[#allocation2 + $0x128] sm:$0x1] %vm588, 0.0
      %626 = vst.msk [vmem:[#allocation2 + $0x130] sm:$0xff] %vm586, 0.0
      %627 = vst.msk [vmem:[#allocation2 + $0x138] sm:$0x1] %vm588, 0.0
      %628 = vst.msk [vmem:[#allocation2 + $0x140] sm:$0xff] %vm586, 0.0
      %629 = vst.msk [vmem:[#allocation2 + $0x148] sm:$0x1] %vm588, 0.0
      %630 = vst.msk [vmem:[#allocation2 + $0x150] sm:$0xff] %vm586, 0.0
      %631 = vst.msk [vmem:[#allocation2 + $0x158] sm:$0x1] %vm588, 0.0
      %632 = vst.msk [vmem:[#allocation2 + $0x160] sm:$0xff] %vm586, 0.0
      %633 = vst.msk [vmem:[#allocation2 + $0x168] sm:$0x1] %vm588, 0.0
      %634 = vst.msk [vmem:[#allocation2 + $0x170] sm:$0xff] %vm586, 0.0
      %635 = vst.msk [vmem:[#allocation2 + $0x178] sm:$0x1] %vm588, 0.0
      %636 = vst.msk [vmem:[#allocation2 + $0x180] sm:$0xff] %vm586, 0.0
      %637 = vst.msk [vmem:[#allocation2 + $0x188] sm:$0x1] %vm588, 0.0
      %638 = vst.msk [vmem:[#allocation2 + $0x190] sm:$0xff] %vm586, 0.0
      %639 = vst.msk [vmem:[#allocation2 + $0x198] sm:$0x1] %vm588, 0.0
      %640 = vst.msk [vmem:[#allocation2 + $0x1a0] sm:$0xff] %vm586, 0.0
      %641 = vst.msk [vmem:[#allocation2 + $0x1a8] sm:$0x1] %vm588, 0.0
      %642 = vst.msk [vmem:[#allocation2 + $0x1b0] sm:$0xff] %vm586, 0.0
      %643 = vst.msk [vmem:[#allocation2 + $0x1b8] sm:$0x1] %vm588, 0.0
      %644 = vst.msk [vmem:[#allocation2 + $0x1c0] sm:$0xff] %vm586, 0.0
      %645 = vst.msk [vmem:[#allocation2 + $0x1c8] sm:$0x1] %vm588, 0.0
      %646 = vst.msk [vmem:[#allocation2 + $0x1d0] sm:$0xff] %vm586, 0.0
      %647 = vst.msk [vmem:[#allocation2 + $0x1d8] sm:$0x1] %vm588, 0.0
      %648 = vst.msk [vmem:[#allocation2 + $0x1e0] sm:$0xff] %vm586, 0.0
      %649 = vst.msk [vmem:[#allocation2 + $0x1e8] sm:$0x1] %vm588, 0.0
      %650 = vst.msk [vmem:[#allocation2 + $0x1f0] sm:$0xff] %vm586, 0.0
      %651 = vst.msk [vmem:[#allocation2 + $0x1f8] sm:$0x1] %vm588, 0.0
      %652 = vst.msk [vmem:[#allocation2 + $0x200] sm:$0xff] %vm586, 0.0
      %653 = vst.msk [vmem:[#allocation2 + $0x208] sm:$0x1] %vm588, 0.0
      %654 = vst.msk [vmem:[#allocation2 + $0x210] sm:$0xff] %vm586, 0.0
      %655 = vst.msk [vmem:[#allocation2 + $0x218] sm:$0x1] %vm588, 0.0
      %656 = vst.msk [vmem:[#allocation2 + $0x220] sm:$0xff] %vm586, 0.0
      %657 = vst.msk [vmem:[#allocation2 + $0x228] sm:$0x1] %vm588, 0.0
      %658 = vst.msk [vmem:[#allocation2 + $0x230] sm:$0xff] %vm586, 0.0
      %659 = vst.msk [vmem:[#allocation2 + $0x238] sm:$0x1] %vm588, 0.0
      %s660 = scalar_lea.vmem [#allocation2], 432
      %661 = vst.msk [vmem:[%s660] sm:$0xff] %vm586, %v578
      %662 = vst.msk [vmem:[%s660 + $0x10] sm:$0xff] %vm586, %v579
      %663 = vst.msk [vmem:[%s660 + $0x20] sm:$0xff] %vm586, %v580
      %664 = vst.msk [vmem:[%s660 + $0x30] sm:$0xff] %vm586, %v581
      %665 = vst.msk [vmem:[%s660 + $0x40] sm:$0xff] %vm586, %v582
      %666 = vst.msk [vmem:[%s660 + $0x50] sm:$0xff] %vm586, %v583
      %667 = vst.msk [vmem:[%s660 + $0x60] sm:$0xff] %vm586, %v584
      %668 = vst.msk [vmem:[%s660 + $0x70] sm:$0xff] %vm586, %v585
      %677 = vrot.lane.b32.xlu0 %v578, 120
      %v678 = vpop.permute.xlu0 %677
      %679 = vrot.lane.b32.xlu0 %v579, 120
      %v680 = vpop.permute.xlu0 %679
      %681 = vrot.lane.b32.xlu0 %v580, 120
      %v682 = vpop.permute.xlu0 %681
      %683 = vrot.lane.b32.xlu0 %v581, 120
      %v684 = vpop.permute.xlu0 %683
      %685 = vrot.lane.b32.xlu0 %v582, 120
      %v686 = vpop.permute.xlu0 %685
      %687 = vrot.lane.b32.xlu0 %v583, 120
      %v688 = vpop.permute.xlu0 %687
      %689 = vrot.lane.b32.xlu0 %v584, 120
      %v690 = vpop.permute.xlu0 %689
      %691 = vrot.lane.b32.xlu0 %v585, 120
      %v692 = vpop.permute.xlu0 %691
      %s701 = scalar_lea.vmem [#allocation2], 288
      %702 = vst.msk [vmem:[%s701 + $0x1] sm:$0xff] %vm586, %v678
      %703 = vst.msk [vmem:[%s701 + $0x11] sm:$0xff] %vm586, %v680
      %704 = vst.msk [vmem:[%s701 + $0x21] sm:$0xff] %vm586, %v682
      %705 = vst.msk [vmem:[%s701 + $0x31] sm:$0xff] %vm586, %v684
      %706 = vst.msk [vmem:[%s701 + $0x41] sm:$0xff] %vm586, %v686
      %707 = vst.msk [vmem:[%s701 + $0x51] sm:$0xff] %vm586, %v688
      %708 = vst.msk [vmem:[%s701 + $0x61] sm:$0xff] %vm586, %v690
      %709 = vst.msk [vmem:[%s701 + $0x71] sm:$0xff] %vm586, %v692
      %710 = vrot.lane.b32.xlu0 %v578, 112
      %v711 = vpop.permute.xlu0 %710
      %712 = vrot.lane.b32.xlu0 %v579, 112
      %v713 = vpop.permute.xlu0 %712
      %714 = vrot.lane.b32.xlu0 %v580, 112
      %v715 = vpop.permute.xlu0 %714
      %716 = vrot.lane.b32.xlu0 %v581, 112
      %v717 = vpop.permute.xlu0 %716
      %718 = vrot.lane.b32.xlu0 %v582, 112
      %v719 = vpop.permute.xlu0 %718
      %720 = vrot.lane.b32.xlu0 %v583, 112
      %v721 = vpop.permute.xlu0 %720
      %722 = vrot.lane.b32.xlu0 %v584, 112
      %v723 = vpop.permute.xlu0 %722
      %724 = vrot.lane.b32.xlu0 %v585, 112
      %v725 = vpop.permute.xlu0 %724
      %s734 = scalar_lea.vmem [#allocation2], 160
      %735 = vst.msk [vmem:[%s734] sm:$0xff] %vm586, %v711
      %736 = vst.msk [vmem:[%s734 + $0x10] sm:$0xff] %vm586, %v713
      %737 = vst.msk [vmem:[%s734 + $0x20] sm:$0xff] %vm586, %v715
      %738 = vst.msk [vmem:[%s734 + $0x30] sm:$0xff] %vm586, %v717
      %739 = vst.msk [vmem:[%s734 + $0x40] sm:$0xff] %vm586, %v719
      %740 = vst.msk [vmem:[%s734 + $0x50] sm:$0xff] %vm586, %v721
      %741 = vst.msk [vmem:[%s734 + $0x60] sm:$0xff] %vm586, %v723
      %742 = vst.msk [vmem:[%s734 + $0x70] sm:$0xff] %vm586, %v725
      %743 = vrot.lane.b32.xlu0 %v578, 104
      %v744 = vpop.permute.xlu0 %743
      %745 = vrot.lane.b32.xlu0 %v579, 104
      %v746 = vpop.permute.xlu0 %745
      %747 = vrot.lane.b32.xlu0 %v580, 104
      %v748 = vpop.permute.xlu0 %747
      %749 = vrot.lane.b32.xlu0 %v581, 104
      %v750 = vpop.permute.xlu0 %749
      %751 = vrot.lane.b32.xlu0 %v582, 104
      %v752 = vpop.permute.xlu0 %751
      %753 = vrot.lane.b32.xlu0 %v583, 104
      %v754 = vpop.permute.xlu0 %753
      %755 = vrot.lane.b32.xlu0 %v584, 104
      %v756 = vpop.permute.xlu0 %755
      %757 = vrot.lane.b32.xlu0 %v585, 104
      %v758 = vpop.permute.xlu0 %757
      %s767 = scalar_lea.vmem [#allocation2], 16
      %768 = vst.msk [vmem:[%s767 + $0x1] sm:$0xff] %vm586, %v744
      %769 = vst.msk [vmem:[%s767 + $0x11] sm:$0xff] %vm586, %v746
      %770 = vst.msk [vmem:[%s767 + $0x21] sm:$0xff] %vm586, %v748
      %771 = vst.msk [vmem:[%s767 + $0x31] sm:$0xff] %vm586, %v750
      %772 = vst.msk [vmem:[%s767 + $0x41] sm:$0xff] %vm586, %v752
      %773 = vst.msk [vmem:[%s767 + $0x51] sm:$0xff] %vm586, %v754
      %774 = vst.msk [vmem:[%s767 + $0x61] sm:$0xff] %vm586, %v756
      %775 = vst.msk [vmem:[%s767 + $0x71] sm:$0xff] %vm586, %v758
      %v776 = vld [vmem:[#allocation2] sm:$0xff]
      %v777 = vld [vmem:[#allocation2 + $0x10] sm:$0xff]
      %v778 = vld [vmem:[#allocation2 + $0x20] sm:$0xff]
      %v779 = vld [vmem:[#allocation2 + $0x30] sm:$0xff]
      %v780 = vld [vmem:[#allocation2 + $0x40] sm:$0xff]
      %v781 = vld [vmem:[#allocation2 + $0x50] sm:$0xff]
      %v782 = vld [vmem:[#allocation2 + $0x60] sm:$0xff]
      %v783 = vld [vmem:[#allocation2 + $0x70] sm:$0xff]
      %784 = vst.msk [vmem:[#allocation3] sm:$0xff] %vm586, %v776
      %785 = vst.msk [vmem:[#allocation3 + $0x8] sm:$0xff] %vm586, %v777
      %786 = vst.msk [vmem:[#allocation3 + $0x10] sm:$0xff] %vm586, %v778
      %787 = vst.msk [vmem:[#allocation3 + $0x18] sm:$0xff] %vm586, %v779
      %788 = vst.msk [vmem:[#allocation3 + $0x20] sm:$0xff] %vm586, %v780
      %789 = vst.msk [vmem:[#allocation3 + $0x28] sm:$0xff] %vm586, %v781
      %790 = vst.msk [vmem:[#allocation3 + $0x30] sm:$0xff] %vm586, %v782
      %791 = vst.msk [vmem:[#allocation3 + $0x38] sm:$0xff] %vm586, %v783
      %s792 = scalar_lea.vmem [#allocation2], 144
      %v793 = vld [vmem:[%s792] sm:$0xff]
      %v794 = vld [vmem:[%s792 + $0x10] sm:$0xff]
      %v795 = vld [vmem:[%s792 + $0x20] sm:$0xff]
      %v796 = vld [vmem:[%s792 + $0x30] sm:$0xff]
      %v797 = vld [vmem:[%s792 + $0x40] sm:$0xff]
      %v798 = vld [vmem:[%s792 + $0x50] sm:$0xff]
      %v799 = vld [vmem:[%s792 + $0x60] sm:$0xff]
      %v800 = vld [vmem:[%s792 + $0x70] sm:$0xff]
      %809 = vrot.lane.b32.xlu0 %v793, 8
      %v810 = vpop.permute.xlu0 %809
      %811 = vrot.lane.b32.xlu0 %v794, 8
      %v812 = vpop.permute.xlu0 %811
      %813 = vrot.lane.b32.xlu0 %v795, 8
      %v814 = vpop.permute.xlu0 %813
      %815 = vrot.lane.b32.xlu0 %v796, 8
      %v816 = vpop.permute.xlu0 %815
      %817 = vrot.lane.b32.xlu0 %v797, 8
      %v818 = vpop.permute.xlu0 %817
      %819 = vrot.lane.b32.xlu0 %v798, 8
      %v820 = vpop.permute.xlu0 %819
      %821 = vrot.lane.b32.xlu0 %v799, 8
      %v822 = vpop.permute.xlu0 %821
      %823 = vrot.lane.b32.xlu0 %v800, 8
      %v824 = vpop.permute.xlu0 %823
      %vm833 = vcmask 130112
      %834 = vst.msk [vmem:[#allocation3] sm:$0xff] %vm833, %v810
      %835 = vst.msk [vmem:[#allocation3 + $0x8] sm:$0xff] %vm833, %v812
      %836 = vst.msk [vmem:[#allocation3 + $0x10] sm:$0xff] %vm833, %v814
      %837 = vst.msk [vmem:[#allocation3 + $0x18] sm:$0xff] %vm833, %v816
      %838 = vst.msk [vmem:[#allocation3 + $0x20] sm:$0xff] %vm833, %v818
      %839 = vst.msk [vmem:[#allocation3 + $0x28] sm:$0xff] %vm833, %v820
      %840 = vst.msk [vmem:[#allocation3 + $0x30] sm:$0xff] %vm833, %v822
      %841 = vst.msk [vmem:[#allocation3 + $0x38] sm:$0xff] %vm833, %v824
      %v842 = vld [vmem:[#allocation2 + $0x1] sm:$0xff]
      %v843 = vld [vmem:[#allocation2 + $0x11] sm:$0xff]
      %v844 = vld [vmem:[#allocation2 + $0x21] sm:$0xff]
      %v845 = vld [vmem:[#allocation2 + $0x31] sm:$0xff]
      %v846 = vld [vmem:[#allocation2 + $0x41] sm:$0xff]
      %v847 = vld [vmem:[#allocation2 + $0x51] sm:$0xff]
      %v848 = vld [vmem:[#allocation2 + $0x61] sm:$0xff]
      %v849 = vld [vmem:[#allocation2 + $0x71] sm:$0xff]
      %858 = vrot.lane.b32.xlu0 %v842, 16
      %v859 = vpop.permute.xlu0 %858
      %860 = vrot.lane.b32.xlu0 %v843, 16
      %v861 = vpop.permute.xlu0 %860
      %862 = vrot.lane.b32.xlu0 %v844, 16
      %v863 = vpop.permute.xlu0 %862
      %864 = vrot.lane.b32.xlu0 %v845, 16
      %v865 = vpop.permute.xlu0 %864
      %866 = vrot.lane.b32.xlu0 %v846, 16
      %v867 = vpop.permute.xlu0 %866
      %868 = vrot.lane.b32.xlu0 %v847, 16
      %v869 = vpop.permute.xlu0 %868
      %870 = vrot.lane.b32.xlu0 %v848, 16
      %v871 = vpop.permute.xlu0 %870
      %872 = vrot.lane.b32.xlu0 %v849, 16
      %v873 = vpop.permute.xlu0 %872
      %vm882 = vcmask 195712
      %883 = vst.msk [vmem:[#allocation3] sm:$0xff] %vm882, %v859
      %884 = vst.msk [vmem:[#allocation3 + $0x8] sm:$0xff] %vm882, %v861
      %885 = vst.msk [vmem:[#allocation3 + $0x10] sm:$0xff] %vm882, %v863
      %886 = vst.msk [vmem:[#allocation3 + $0x18] sm:$0xff] %vm882, %v865
      %887 = vst.msk [vmem:[#allocation3 + $0x20] sm:$0xff] %vm882, %v867
      %888 = vst.msk [vmem:[#allocation3 + $0x28] sm:$0xff] %vm882, %v869
      %889 = vst.msk [vmem:[#allocation3 + $0x30] sm:$0xff] %vm882, %v871
      %890 = vst.msk [vmem:[#allocation3 + $0x38] sm:$0xff] %vm882, %v873
      %v891 = vld [vmem:[%s701] sm:$0xff]
      %v892 = vld [vmem:[%s701 + $0x10] sm:$0xff]
      %v893 = vld [vmem:[%s701 + $0x20] sm:$0xff]
      %v894 = vld [vmem:[%s701 + $0x30] sm:$0xff]
      %v895 = vld [vmem:[%s701 + $0x40] sm:$0xff]
      %v896 = vld [vmem:[%s701 + $0x50] sm:$0xff]
      %v897 = vld [vmem:[%s701 + $0x60] sm:$0xff]
      %v898 = vld [vmem:[%s701 + $0x70] sm:$0xff]
      %907 = vrot.lane.b32.xlu0 %v891, 24
      %v908 = vpop.permute.xlu0 %907
      %909 = vrot.lane.b32.xlu0 %v892, 24
      %v910 = vpop.permute.xlu0 %909
      %911 = vrot.lane.b32.xlu0 %v893, 24
      %v912 = vpop.permute.xlu0 %911
      %913 = vrot.lane.b32.xlu0 %v894, 24
      %v914 = vpop.permute.xlu0 %913
      %915 = vrot.lane.b32.xlu0 %v895, 24
      %v916 = vpop.permute.xlu0 %915
      %917 = vrot.lane.b32.xlu0 %v896, 24
      %v918 = vpop.permute.xlu0 %917
      %919 = vrot.lane.b32.xlu0 %v897, 24
      %v920 = vpop.permute.xlu0 %919
      %921 = vrot.lane.b32.xlu0 %v898, 24
      %v922 = vpop.permute.xlu0 %921
      %vm931 = vcmask 261312
      %932 = vst.msk [vmem:[#allocation3] sm:$0xff] %vm931, %v908
      %933 = vst.msk [vmem:[#allocation3 + $0x8] sm:$0xff] %vm931, %v910
      %934 = vst.msk [vmem:[#allocation3 + $0x10] sm:$0xff] %vm931, %v912
      %935 = vst.msk [vmem:[#allocation3 + $0x18] sm:$0xff] %vm931, %v914
      %936 = vst.msk [vmem:[#allocation3 + $0x20] sm:$0xff] %vm931, %v916
      %937 = vst.msk [vmem:[#allocation3 + $0x28] sm:$0xff] %vm931, %v918
      %938 = vst.msk [vmem:[#allocation3 + $0x30] sm:$0xff] %vm931, %v920
      %939 = vst.msk [vmem:[#allocation3 + $0x38] sm:$0xff] %vm931, %v922
      %v940 = vld [vmem:[%s660] sm:$0xff]
      %v941 = vld [vmem:[%s660 + $0x10] sm:$0xff]
      %v942 = vld [vmem:[%s660 + $0x20] sm:$0xff]
      %v943 = vld [vmem:[%s660 + $0x30] sm:$0xff]
      %v944 = vld [vmem:[%s660 + $0x40] sm:$0xff]
      %v945 = vld [vmem:[%s660 + $0x50] sm:$0xff]
      %v946 = vld [vmem:[%s660 + $0x60] sm:$0xff]
      %v947 = vld [vmem:[%s660 + $0x70] sm:$0xff]
      %956 = vrot.lane.b32.xlu0 %v940, 32
      %v957 = vpop.permute.xlu0 %956
      %958 = vrot.lane.b32.xlu0 %v941, 32
      %v959 = vpop.permute.xlu0 %958
      %960 = vrot.lane.b32.xlu0 %v942, 32
      %v961 = vpop.permute.xlu0 %960
      %962 = vrot.lane.b32.xlu0 %v943, 32
      %v963 = vpop.permute.xlu0 %962
      %964 = vrot.lane.b32.xlu0 %v944, 32
      %v965 = vpop.permute.xlu0 %964
      %966 = vrot.lane.b32.xlu0 %v945, 32
      %v967 = vpop.permute.xlu0 %966
      %968 = vrot.lane.b32.xlu0 %v946, 32
      %v969 = vpop.permute.xlu0 %968
      %970 = vrot.lane.b32.xlu0 %v947, 32
      %v971 = vpop.permute.xlu0 %970
      %vm980 = vcmask 326912
      %981 = vst.msk [vmem:[#allocation3] sm:$0xff] %vm980, %v957
      %982 = vst.msk [vmem:[#allocation3 + $0x8] sm:$0xff] %vm980, %v959
      %983 = vst.msk [vmem:[#allocation3 + $0x10] sm:$0xff] %vm980, %v961
      %984 = vst.msk [vmem:[#allocation3 + $0x18] sm:$0xff] %vm980, %v963
      %985 = vst.msk [vmem:[#allocation3 + $0x20] sm:$0xff] %vm980, %v965
      %986 = vst.msk [vmem:[#allocation3 + $0x28] sm:$0xff] %vm980, %v967
      %987 = vst.msk [vmem:[#allocation3 + $0x30] sm:$0xff] %vm980, %v969
      %988 = vst.msk [vmem:[#allocation3 + $0x38] sm:$0xff] %vm980, %v971
      %v989 = vld [vmem:[%s701 + $0x1] sm:$0xff]
      %v990 = vld [vmem:[%s701 + $0x11] sm:$0xff]
      %v991 = vld [vmem:[%s701 + $0x21] sm:$0xff]
      %v992 = vld [vmem:[%s701 + $0x31] sm:$0xff]
      %v993 = vld [vmem:[%s701 + $0x41] sm:$0xff]
      %v994 = vld [vmem:[%s701 + $0x51] sm:$0xff]
      %v995 = vld [vmem:[%s701 + $0x61] sm:$0xff]
      %v996 = vld [vmem:[%s701 + $0x71] sm:$0xff]
      %1005 = vrot.lane.b32.xlu0 %v989, 40
      %v1006 = vpop.permute.xlu0 %1005
      %1007 = vrot.lane.b32.xlu0 %v990, 40
      %v1008 = vpop.permute.xlu0 %1007
      %1009 = vrot.lane.b32.xlu0 %v991, 40
      %v1010 = vpop.permute.xlu0 %1009
      %1011 = vrot.lane.b32.xlu0 %v992, 40
      %v1012 = vpop.permute.xlu0 %1011
      %1013 = vrot.lane.b32.xlu0 %v993, 40
      %v1014 = vpop.permute.xlu0 %1013
      %1015 = vrot.lane.b32.xlu0 %v994, 40
      %v1016 = vpop.permute.xlu0 %1015
      %1017 = vrot.lane.b32.xlu0 %v995, 40
      %v1018 = vpop.permute.xlu0 %1017
      %1019 = vrot.lane.b32.xlu0 %v996, 40
      %v1020 = vpop.permute.xlu0 %1019
      %vm1029 = vcmask 392512
      %1030 = vst.msk [vmem:[#allocation3] sm:$0xff] %vm1029, %v1006
      %1031 = vst.msk [vmem:[#allocation3 + $0x8] sm:$0xff] %vm1029, %v1008
      %1032 = vst.msk [vmem:[#allocation3 + $0x10] sm:$0xff] %vm1029, %v1010
      %1033 = vst.msk [vmem:[#allocation3 + $0x18] sm:$0xff] %vm1029, %v1012
      %1034 = vst.msk [vmem:[#allocation3 + $0x20] sm:$0xff] %vm1029, %v1014
      %1035 = vst.msk [vmem:[#allocation3 + $0x28] sm:$0xff] %vm1029, %v1016
      %1036 = vst.msk [vmem:[#allocation3 + $0x30] sm:$0xff] %vm1029, %v1018
      %1037 = vst.msk [vmem:[#allocation3 + $0x38] sm:$0xff] %vm1029, %v1020
      %v1038 = vld [vmem:[%s767] sm:$0xff]
      %v1039 = vld [vmem:[%s767 + $0x10] sm:$0xff]
      %v1040 = vld [vmem:[%s767 + $0x20] sm:$0xff]
      %v1041 = vld [vmem:[%s767 + $0x30] sm:$0xff]
      %v1042 = vld [vmem:[%s767 + $0x40] sm:$0xff]
      %v1043 = vld [vmem:[%s767 + $0x50] sm:$0xff]
      %v1044 = vld [vmem:[%s767 + $0x60] sm:$0xff]
      %v1045 = vld [vmem:[%s767 + $0x70] sm:$0xff]
      %1054 = vrot.lane.b32.xlu0 %v1038, 48
      %v1055 = vpop.permute.xlu0 %1054
      %1056 = vrot.lane.b32.xlu0 %v1039, 48
      %v1057 = vpop.permute.xlu0 %1056
      %1058 = vrot.lane.b32.xlu0 %v1040, 48
      %v1059 = vpop.permute.xlu0 %1058
      %1060 = vrot.lane.b32.xlu0 %v1041, 48
      %v1061 = vpop.permute.xlu0 %1060
      %1062 = vrot.lane.b32.xlu0 %v1042, 48
      %v1063 = vpop.permute.xlu0 %1062
      %1064 = vrot.lane.b32.xlu0 %v1043, 48
      %v1065 = vpop.permute.xlu0 %1064
      %1066 = vrot.lane.b32.xlu0 %v1044, 48
      %v1067 = vpop.permute.xlu0 %1066
      %1068 = vrot.lane.b32.xlu0 %v1045, 48
      %v1069 = vpop.permute.xlu0 %1068
      %vm1078 = vcmask 458112
      %1079 = vst.msk [vmem:[#allocation3] sm:$0xff] %vm1078, %v1055
      %1080 = vst.msk [vmem:[#allocation3 + $0x8] sm:$0xff] %vm1078, %v1057
      %1081 = vst.msk [vmem:[#allocation3 + $0x10] sm:$0xff] %vm1078, %v1059
      %1082 = vst.msk [vmem:[#allocation3 + $0x18] sm:$0xff] %vm1078, %v1061
      %1083 = vst.msk [vmem:[#allocation3 + $0x20] sm:$0xff] %vm1078, %v1063
      %1084 = vst.msk [vmem:[#allocation3 + $0x28] sm:$0xff] %vm1078, %v1065
      %1085 = vst.msk [vmem:[#allocation3 + $0x30] sm:$0xff] %vm1078, %v1067
      %1086 = vst.msk [vmem:[#allocation3 + $0x38] sm:$0xff] %vm1078, %v1069
      %v1087 = vld [vmem:[%s734] sm:$0xff]
      %v1088 = vld [vmem:[%s734 + $0x10] sm:$0xff]
      %v1089 = vld [vmem:[%s734 + $0x20] sm:$0xff]
      %v1090 = vld [vmem:[%s734 + $0x30] sm:$0xff]
      %v1091 = vld [vmem:[%s734 + $0x40] sm:$0xff]
      %v1092 = vld [vmem:[%s734 + $0x50] sm:$0xff]
      %v1093 = vld [vmem:[%s734 + $0x60] sm:$0xff]
      %v1094 = vld [vmem:[%s734 + $0x70] sm:$0xff]
      %1103 = vrot.lane.b32.xlu0 %v1087, 56
      %v1104 = vpop.permute.xlu0 %1103
      %1105 = vrot.lane.b32.xlu0 %v1088, 56
      %v1106 = vpop.permute.xlu0 %1105
      %1107 = vrot.lane.b32.xlu0 %v1089, 56
      %v1108 = vpop.permute.xlu0 %1107
      %1109 = vrot.lane.b32.xlu0 %v1090, 56
      %v1110 = vpop.permute.xlu0 %1109
      %1111 = vrot.lane.b32.xlu0 %v1091, 56
      %v1112 = vpop.permute.xlu0 %1111
      %1113 = vrot.lane.b32.xlu0 %v1092, 56
      %v1114 = vpop.permute.xlu0 %1113
      %1115 = vrot.lane.b32.xlu0 %v1093, 56
      %v1116 = vpop.permute.xlu0 %1115
      %1117 = vrot.lane.b32.xlu0 %v1094, 56
      %v1118 = vpop.permute.xlu0 %1117
      %vm1127 = vcmask 523712
      %1128 = vst.msk [vmem:[#allocation3] sm:$0xff] %vm1127, %v1104
      %1129 = vst.msk [vmem:[#allocation3 + $0x8] sm:$0xff] %vm1127, %v1106
      %1130 = vst.msk [vmem:[#allocation3 + $0x10] sm:$0xff] %vm1127, %v1108
      %1131 = vst.msk [vmem:[#allocation3 + $0x18] sm:$0xff] %vm1127, %v1110
      %1132 = vst.msk [vmem:[#allocation3 + $0x20] sm:$0xff] %vm1127, %v1112
      %1133 = vst.msk [vmem:[#allocation3 + $0x28] sm:$0xff] %vm1127, %v1114
      %1134 = vst.msk [vmem:[#allocation3 + $0x30] sm:$0xff] %vm1127, %v1116
      %1135 = vst.msk [vmem:[#allocation3 + $0x38] sm:$0xff] %vm1127, %v1118
      %v1136 = vld [vmem:[%s767 + $0x1] sm:$0xff]
      %v1137 = vld [vmem:[%s767 + $0x11] sm:$0xff]
      %v1138 = vld [vmem:[%s767 + $0x21] sm:$0xff]
      %v1139 = vld [vmem:[%s767 + $0x31] sm:$0xff]
      %v1140 = vld [vmem:[%s767 + $0x41] sm:$0xff]
      %v1141 = vld [vmem:[%s767 + $0x51] sm:$0xff]
      %v1142 = vld [vmem:[%s767 + $0x61] sm:$0xff]
      %v1143 = vld [vmem:[%s767 + $0x71] sm:$0xff]
      %1152 = vrot.lane.b32.xlu0 %v1136, 64
      %v1153 = vpop.permute.xlu0 %1152
      %1154 = vrot.lane.b32.xlu0 %v1137, 64
      %v1155 = vpop.permute.xlu0 %1154
      %1156 = vrot.lane.b32.xlu0 %v1138, 64
      %v1157 = vpop.permute.xlu0 %1156
      %1158 = vrot.lane.b32.xlu0 %v1139, 64
      %v1159 = vpop.permute.xlu0 %1158
      %1160 = vrot.lane.b32.xlu0 %v1140, 64
      %v1161 = vpop.permute.xlu0 %1160
      %1162 = vrot.lane.b32.xlu0 %v1141, 64
      %v1163 = vpop.permute.xlu0 %1162
      %1164 = vrot.lane.b32.xlu0 %v1142, 64
      %v1165 = vpop.permute.xlu0 %1164
      %1166 = vrot.lane.b32.xlu0 %v1143, 64
      %v1167 = vpop.permute.xlu0 %1166
      %vm1176 = vcmask 589312
      %1177 = vst.msk [vmem:[#allocation3] sm:$0xff] %vm1176, %v1153
      %1178 = vst.msk [vmem:[#allocation3 + $0x8] sm:$0xff] %vm1176, %v1155
      %1179 = vst.msk [vmem:[#allocation3 + $0x10] sm:$0xff] %vm1176, %v1157
      %1180 = vst.msk [vmem:[#allocation3 + $0x18] sm:$0xff] %vm1176, %v1159
      %1181 = vst.msk [vmem:[#allocation3 + $0x20] sm:$0xff] %vm1176, %v1161
      %1182 = vst.msk [vmem:[#allocation3 + $0x28] sm:$0xff] %vm1176, %v1163
      %1183 = vst.msk [vmem:[#allocation3 + $0x30] sm:$0xff] %vm1176, %v1165
      %1184 = vst.msk [vmem:[#allocation3 + $0x38] sm:$0xff] %vm1176, %v1167
      %v1185 = vld [vmem:[#allocation3] sm:$0xff]
      %v1186 = vld [vmem:[#allocation3 + $0x8] sm:$0xff]
      %v1187 = vld [vmem:[#allocation3 + $0x10] sm:$0xff]
      %v1188 = vld [vmem:[#allocation3 + $0x18] sm:$0xff]
      %v1189 = vld [vmem:[#allocation3 + $0x20] sm:$0xff]
      %v1190 = vld [vmem:[#allocation3 + $0x28] sm:$0xff]
      %v1191 = vld [vmem:[#allocation3 + $0x30] sm:$0xff]
      %v1192 = vld [vmem:[#allocation3 + $0x38] sm:$0xff]
      %v1193 = vld [vmem:[%s5] sm:$0xff]
      %v1194 = vld [vmem:[%s5 + $0x8] sm:$0xff]
      %v1195 = vld [vmem:[%s5 + $0x10] sm:$0xff]
      %v1196 = vld [vmem:[%s5 + $0x18] sm:$0xff]
      %v1197 = vld [vmem:[%s5 + $0x20] sm:$0xff]
      %v1198 = vld [vmem:[%s5 + $0x28] sm:$0xff]
      %v1199 = vld [vmem:[%s5 + $0x30] sm:$0xff]
      %v1200 = vld [vmem:[%s5 + $0x38] sm:$0xff]
      %v1201 = vld [vmem:[%s5 + $0x40] sm:$0xff]
      %v1202 = vld [vmem:[%s6] sm:$0x1]
      %v1204 = vperm.slane %v1202, 0
      %vm1206 = vcmask 588800
      %v1208 = vsel %vm1206, %v1185, 0
      %v1211 = vsel %vm1206, %v1186, 0
      %v1214 = vsel %vm1206, %v1187, 0
      %v1217 = vsel %vm1206, %v1188, 0
      %v1220 = vsel %vm1206, %v1189, 0
      %v1223 = vsel %vm1206, %v1190, 0
      %v1226 = vsel %vm1206, %v1191, 0
      %v1229 = vsel %vm1206, %v1192, 0
      %1231 = vmatpush.msra.mxu0 0.0
      %1232 = vmatpush.msra.mxu0 0.0
      %1233 = vmatpush.msra.mxu0 0.0
      %1234 = vmatpush.msra.mxu0 0.0
      %1235 = vmatpush.msra.mxu0 0.0
      %1236 = vmatpush.msra.mxu0 0.0
      %1237 = vmatpush.msra.mxu0 0.0
      %1238 = vmatpush.msra.mxu0 %v1201
      %1239 = vmatpush.msra.mxu0 %v1200
      %1240 = vmatpush.msra.mxu0 %v1199
      %1241 = vmatpush.msra.mxu0 %v1198
      %1242 = vmatpush.msra.mxu0 %v1197
      %1243 = vmatpush.msra.mxu0 %v1196
      %1244 = vmatpush.msra.mxu0 %v1195
      %1245 = vmatpush.msra.mxu0 %v1194
      %1246 = vmatpush.msra.mxu0 %v1193
      %1247 = vmatmul.f32.gmra.mxu0 %v1208
      %v1248 = vpop.f32.mrf.mxu0
      %v1249 = vadd.f32 %v1204, %v1248
      %1250 = vmatmul.f32.gmra.mxu0 %v1211
      %v1251 = vpop.f32.mrf.mxu0
      %v1252 = vadd.f32 %v1204, %v1251
      %1253 = vmatmul.f32.gmra.mxu0 %v1214
      %v1254 = vpop.f32.mrf.mxu0
      %v1255 = vadd.f32 %v1204, %v1254
      %1256 = vmatmul.f32.gmra.mxu0 %v1217
      %v1257 = vpop.f32.mrf.mxu0
      %v1258 = vadd.f32 %v1204, %v1257
      %1259 = vmatmul.f32.gmra.mxu0 %v1220
      %v1260 = vpop.f32.mrf.mxu0
      %v1261 = vadd.f32 %v1204, %v1260
      %1262 = vmatmul.f32.gmra.mxu0 %v1223
      %v1263 = vpop.f32.mrf.mxu0
      %v1264 = vadd.f32 %v1204, %v1263
      %1265 = vmatmul.f32.gmra.mxu0 %v1226
      %v1266 = vpop.f32.mrf.mxu0
      %v1267 = vadd.f32 %v1204, %v1266
      %1268 = vmatmul.f32.gmra.mxu0 %v1229
      %v1269 = vpop.f32.mrf.mxu0
      %v1270 = vadd.f32 %v1204, %v1269
      %1271 = vdwg.mxu0
      %vm1272 = vcmp.gt.f32.partialorder %v1249, 0.0
      %vm1273 = vcmp.gt.f32.partialorder %v1252, 0.0
      %vm1274 = vcmp.gt.f32.partialorder %v1255, 0.0
      %vm1275 = vcmp.gt.f32.partialorder %v1258, 0.0
      %vm1276 = vcmp.gt.f32.partialorder %v1261, 0.0
      %vm1277 = vcmp.gt.f32.partialorder %v1264, 0.0
      %vm1278 = vcmp.gt.f32.partialorder %v1267, 0.0
      %vm1279 = vcmp.gt.f32.partialorder %v1270, 0.0
      %v1280 = vmul.f32 %v1249, 0.01
      %v1281 = vmul.f32 %v1252, 0.01
      %v1282 = vmul.f32 %v1255, 0.01
      %v1283 = vmul.f32 %v1258, 0.01
      %v1284 = vmul.f32 %v1261, 0.01
      %v1285 = vmul.f32 %v1264, 0.01
      %v1286 = vmul.f32 %v1267, 0.01
      %v1287 = vmul.f32 %v1270, 0.01
      %v1288 = vsel %vm1272, %v1249, %v1280
      %v1289 = vsel %vm1273, %v1252, %v1281
      %v1290 = vsel %vm1274, %v1255, %v1282
      %v1291 = vsel %vm1275, %v1258, %v1283
      %v1292 = vsel %vm1276, %v1261, %v1284
      %v1293 = vsel %vm1277, %v1264, %v1285
      %v1294 = vsel %vm1278, %v1267, %v1286
      %v1295 = vsel %vm1279, %v1270, %v1287
      %v1296 = vld [vmem:[%s7] sm:$0xff]
      %v1298 = vsel %vm586, %v1288, 0
      %v1301 = vsel %vm586, %v1289, 0
      %v1304 = vsel %vm586, %v1290, 0
      %v1307 = vsel %vm586, %v1291, 0
      %v1310 = vsel %vm586, %v1292, 0
      %v1313 = vsel %vm586, %v1293, 0
      %v1316 = vsel %vm586, %v1294, 0
      %v1319 = vsel %vm586, %v1295, 0
      %1321 = vmatpush.msra.mxu0 0.0
      %1322 = vmatpush.msra.mxu0 0.0
      %1323 = vmatpush.msra.mxu0 0.0
      %1324 = vmatpush.msra.mxu0 0.0
      %1325 = vmatpush.msra.mxu0 0.0
      %1326 = vmatpush.msra.mxu0 0.0
      %1327 = vmatpush.msra.mxu0 0.0
      %1328 = vmatpush.msra.mxu0 0.0
      %1329 = vmatpush.msra.mxu0 0.0
      %1330 = vmatpush.msra.mxu0 0.0
      %1331 = vmatpush.msra.mxu0 0.0
      %1332 = vmatpush.msra.mxu0 0.0
      %1333 = vmatpush.msra.mxu0 0.0
      %1334 = vmatpush.msra.mxu0 0.0
      %1335 = vmatpush.msra.mxu0 0.0
      %1336 = vmatpush.msra.mxu0 %v1296
      %1337 = vmatmul.f32.gmra.mxu0 %v1298
      %v1338 = vpop.f32.mrf.mxu0
      %v1339 = vadd.f32 %v420, %v1338
      %1340 = vmatmul.f32.gmra.mxu0 %v1301
      %v1341 = vpop.f32.mrf.mxu0
      %v1342 = vadd.f32 %v423, %v1341
      %1343 = vmatmul.f32.gmra.mxu0 %v1304
      %v1344 = vpop.f32.mrf.mxu0
      %v1345 = vadd.f32 %v426, %v1344
      %1346 = vmatmul.f32.gmra.mxu0 %v1307
      %v1347 = vpop.f32.mrf.mxu0
      %v1348 = vadd.f32 %v429, %v1347
      %1349 = vmatmul.f32.gmra.mxu0 %v1310
      %v1350 = vpop.f32.mrf.mxu0
      %v1351 = vadd.f32 %v432, %v1350
      %1352 = vmatmul.f32.gmra.mxu0 %v1313
      %v1353 = vpop.f32.mrf.mxu0
      %v1354 = vadd.f32 %v435, %v1353
      %1355 = vmatmul.f32.gmra.mxu0 %v1316
      %v1356 = vpop.f32.mrf.mxu0
      %v1357 = vadd.f32 %v438, %v1356
      %1358 = vmatmul.f32.gmra.mxu0 %v1319
      %v1359 = vpop.f32.mrf.mxu0
      %v1360 = vadd.f32 %v441, %v1359
      %1361 = vdwg.mxu0
      %vm1362 = vcmp.gt.f32.partialorder %v1339, 0.0
      %vm1363 = vcmp.gt.f32.partialorder %v1342, 0.0
      %vm1364 = vcmp.gt.f32.partialorder %v1345, 0.0
      %vm1365 = vcmp.gt.f32.partialorder %v1348, 0.0
      %vm1366 = vcmp.gt.f32.partialorder %v1351, 0.0
      %vm1367 = vcmp.gt.f32.partialorder %v1354, 0.0
      %vm1368 = vcmp.gt.f32.partialorder %v1357, 0.0
      %vm1369 = vcmp.gt.f32.partialorder %v1360, 0.0
      %v1370 = vmul.f32 %v1339, 0.01
      %v1371 = vmul.f32 %v1342, 0.01
      %v1372 = vmul.f32 %v1345, 0.01
      %v1373 = vmul.f32 %v1348, 0.01
      %v1374 = vmul.f32 %v1351, 0.01
      %v1375 = vmul.f32 %v1354, 0.01
      %v1376 = vmul.f32 %v1357, 0.01
      %v1377 = vmul.f32 %v1360, 0.01
      %v1378 = vsel %vm1362, %v1339, %v1370
      %v1379 = vsel %vm1363, %v1342, %v1371
      %v1380 = vsel %vm1364, %v1345, %v1372
      %v1381 = vsel %vm1365, %v1348, %v1373
      %v1382 = vsel %vm1366, %v1351, %v1374
      %v1383 = vsel %vm1367, %v1354, %v1375
      %v1384 = vsel %vm1368, %v1357, %v1376
      %v1385 = vsel %vm1369, %v1360, %v1377
      %1386 = vst.msk [vmem:[%s361] sm:$0xff] %vm586, %v1378
      %1387 = vst.msk [vmem:[%s361 + $0x8] sm:$0xff] %vm586, %v1379
      %1388 = vst.msk [vmem:[%s361 + $0x10] sm:$0xff] %vm586, %v1380
      %1389 = vst.msk [vmem:[%s361 + $0x18] sm:$0xff] %vm586, %v1381
      %1390 = vst.msk [vmem:[%s361 + $0x20] sm:$0xff] %vm586, %v1382
      %1391 = vst.msk [vmem:[%s361 + $0x28] sm:$0xff] %vm586, %v1383
      %1392 = vst.msk [vmem:[%s361 + $0x30] sm:$0xff] %vm586, %v1384
      %1393 = vst.msk [vmem:[%s361 + $0x38] sm:$0xff] %vm586, %v1385
      %s1394 = smul.u32 8, %s21
      %p1395 = scmp.lt.s32.totalorder %s1394, 15
      %s1396 = scalar_select %p1395, %s1394, 15
      %s1397 = smul.addr %s1396, 8
      %s1398 = scalar_lea.vmem %s10, %s1397
      // Predicated region
      $region61: #{tpu_custom_call.1} parent=59 // pred_check
        %p1399 = pneg %p254
      $region62: #{tpu_custom_call.1} parent=59 // pred_check_branch
        %1401 = sbr.rel (%p1399) target = $region64
      $region63: #{tpu_custom_call.1} parent=59 // pred_region
        %s1402 = smul.u32 8, %s21
      $region64: #{tpu_custom_call.1} parent=59 // pred_fallthru
        _
    $region60: #{tpu_custom_call.1} parent=5 // pred_fallthru
      _
    %p1403 = scmp.le.s32.totalorder 2, %s16
    // Predicated region
    $region65: #{tpu_custom_call.1} parent=5 // pred_check
      %p1404 = pneg %p1403
    $region66: #{tpu_custom_call.1} parent=5 // pred_check_branch
      %1406 = sbr.rel (%p1404) target = $region68
    $region67: #{tpu_custom_call.1} parent=5 // pred_region
      %s1407 = ssub.s32 %s16, 2
      // Predicated region
      $region69: #{tpu_custom_call.1} parent=67 // pred_check
        %p1408 = pneg %p260
      $region70: #{tpu_custom_call.1} parent=67 // pred_check_branch
        %1410 = sbr.rel (%p1408) target = $region72
      $region71: #{tpu_custom_call.1} parent=67 // pred_region
        %s1411 = smul.u32 8, %s22
        %p1412 = scmp.lt.s32.totalorder %s1411, 15
        %s1413 = scalar_select %p1412, %s1411, 15
        %s1414 = smul.addr %s1413, 8
        %s1415 = scalar_lea.vmem %s10, %s1414
      $region72: #{tpu_custom_call.1} parent=67 // pred_fallthru
        _
    $region68: #{tpu_custom_call.1} parent=5 // pred_fallthru
      _
  $region6: #{tpu_custom_call.1} parent=0 // loop_footer
    %s20 = sadd.s32 1, %s16
  $region7: #{tpu_custom_call.1} parent=0 // loop_footer_branch
    %15 = sbr.rel target = $region3
  $region8: #{tpu_custom_call.1} parent=0 // loop_exit
    _

</llo_original>
